<compile_context>
chip_gen: v7x
topology: tpu7x:2x2x1
jax: 0.10.0
libtpu: 0.0.40
codegen_flags: <defaults>
</compile_context>

<pallas_src>
import jax
import jax.numpy as jnp
import numpy as np
from jax.experimental import pallas as pl
from jax.experimental.pallas import tpu as pltpu


def _round_up(x, m):
    return (x + m - 1) // m * m


def _vmem_limit_bytes():
    # Leave headroom for compiler-internal scratch; never request all of
    # physical VMEM (v7x: 64 MiB/TC; v5e/v6e: 128 MiB).
    try:
        cap = pltpu.get_tpu_info().vmem_capacity_bytes
    except Exception:
        cap = 64 * 1024 * 1024
    return max(32 * 1024 * 1024,
               min(cap - 16 * 1024 * 1024, 100 * 1024 * 1024))


# ----------------------------------------------------------------------------
# Pallas kernel (one batch element x one pixel tile per grid step)
# ----------------------------------------------------------------------------
def _ocr_kernel(x_ref, k_ref, v_ref,
                wp1_ref, bp1_ref, wp2_ref, bp2_ref,   # f_pixel (scale folded in)
                wu_ref, bu_ref,                       # f_up
                wfc_ref, wff_ref, bf_ref,             # final conv (concat split)
                o_ref):
    x = x_ref[0]          # (C_in, TILE_N) bf16 pixel features for this tile
    k = k_ref[0]          # (M, K)  bf16  precomputed f_object(proxy), M-major
    v = v_ref[0]          # (K, M)  bf16  precomputed f_down(proxy)

    def lin_relu(w_ref, a, b_ref):
        # bf16 MXU inputs, f32 accumulation, f32 bias + ReLU.
        y = jnp.dot(w_ref[...], a.astype(jnp.bfloat16),
                    preferred_element_type=jnp.float32) + b_ref[...]
        return jnp.maximum(y, 0.0)

    # f_pixel(x): (K, TILE_N)   (key_channels**-0.5 already folded into wp2/bp2)
    q = lin_relu(wp2_ref, lin_relu(wp1_ref, x, bp1_ref), bp2_ref)

    # sim[m, n] = sum_k key[m, k] * q[k, n]   -> (M, TILE_N), lane-dense.
    sim = jnp.dot(k, q.astype(jnp.bfloat16),
                  preferred_element_type=jnp.float32)
    sim = sim - jnp.max(sim, axis=0, keepdims=True)
    e = jnp.exp(sim)
    sm = e * pl.reciprocal(jnp.sum(e, axis=0, keepdims=True), approx=True)

    # context[k, n] = sum_m v[k, m] * sm[m, n]  -> (K, TILE_N), then f_up.
    ctx = jnp.dot(v, sm.astype(jnp.bfloat16),
                  preferred_element_type=jnp.float32)
    ctx = lin_relu(wu_ref, ctx, bu_ref)               # (C_in, TILE_N)

    # conv_bn_dropout(cat([context, feats], dim=channels))
    #   = relu(W_ctx @ ctx + W_feat @ x + b)   (concat folded into split weights)
    out = (jnp.dot(wfc_ref[...], ctx.astype(jnp.bfloat16),
                   preferred_element_type=jnp.float32)
           + jnp.dot(wff_ref[...], x, preferred_element_type=jnp.float32)
           + bf_ref[...])
    o_ref[0] = jnp.maximum(out, 0.0).astype(o_ref.dtype)


# ----------------------------------------------------------------------------
# Glue: BN folding, layout, pallas_call wrapper
# ----------------------------------------------------------------------------
def fold_conv_bn(W, b, gamma, beta, mean, var, eps=1e-5):
    """Fold eval-mode BatchNorm2d into a 1x1 Conv2d.

    W: (C_out, C_in), b: (C_out,). Returns a (C_out, C_in) weight (channels-
    first left-multiply) and a (C_out, 1) bias.
    """
    s = gamma / jnp.sqrt(var + eps)
    W_f = W * s[:, None]                       # (C_out, C_in)
    b_f = ((b - mean) * s + beta)[:, None]     # (C_out, 1)
    return W_f.astype(jnp.float32), b_f.astype(jnp.float32)


def spatial_ocr_forward(feats, proxy_feats, params, key_channels, tile_n=1024):
    bs, c, h, w = feats.shape
    n_pix = h * w
    n_obj = proxy_feats.shape[2] * proxy_feats.shape[3]
    c_out = params["wfc"].shape[0]
    key_c = params["wp1"].shape[0]
    scale = float(key_channels) ** -0.5

    # NCHW -> (bs, C, N): reshape only, no layout pass.
    x = feats.reshape(bs, c, n_pix).astype(jnp.bfloat16)
    p = proxy_feats.reshape(bs, c, n_obj)

    # Proxy-side k/v once per batch in plain JAX (M is tiny), so the kernel
    # never repays f_object / f_down per pixel tile.
    def lr(wt, a, b):
        return jax.nn.relu(jnp.einsum("oc,bcm->bom", wt, a) + b[None])
    k = lr(params["wo2"], lr(params["wo1"], p, params["bo1"]), params["bo2"])
    v = lr(params["wd"], p, params["bd"])                      # (bs, K, M)
    k = jnp.transpose(k, (0, 2, 1)).astype(jnp.bfloat16)       # (bs, M, K)
    v = v.astype(jnp.bfloat16)                                 # (bs, K, M)

    # Pixel tiling along lanes: tile_n a multiple of 128; pad N up.
    tile_n = max(128, (int(tile_n) // 128) * 128)
    n_padded = _round_up(n_pix, 128)
    tile_n = min(tile_n, n_padded)
    n_padded = _round_up(n_padded, tile_n)
    n_tiles = n_padded // tile_n
    # Keep both TensorCores busy on dual-core chips at bs == 1.
    if bs == 1 and n_tiles > 1 and n_tiles % 2 == 1:
        n_padded += tile_n
        n_tiles += 1
    if n_padded != n_pix:
        x = jnp.pad(x, ((0, 0), (0, 0), (0, n_padded - n_pix)))

    # Weights bf16 (MXU inputs), biases f32 (added to f32 accumulator).
    # key_channels**-0.5 folded into the second f_pixel stage (ReLU(s*z)=s*ReLU(z)).
    weights = [
        params["wp1"].astype(jnp.bfloat16), params["bp1"],
        (params["wp2"] * scale).astype(jnp.bfloat16), params["bp2"] * scale,
        params["wu"].astype(jnp.bfloat16), params["bu"],
        params["wfc"].astype(jnp.bfloat16),
        params["wff"].astype(jnp.bfloat16),
        params["bf"],
    ]

    def make_specs(single_buffer_weights):
        def wspec(arr):
            nd = arr.ndim
            kwargs = {}
            if single_buffer_weights:
                # Constant-index blocks never re-DMA; single buffer saves VMEM.
                kwargs["pipeline_mode"] = pl.Buffered(1)
            return pl.BlockSpec(arr.shape, lambda b, i, _nd=nd: (0,) * _nd,
                                **kwargs)
        in_specs = (
            [pl.BlockSpec((1, c, tile_n), lambda b, i: (b, 0, i)),
             pl.BlockSpec((1, n_obj, key_c), lambda b, i: (b, 0, 0)),
             pl.BlockSpec((1, key_c, n_obj), lambda b, i: (b, 0, 0))]
            + [wspec(wgt) for wgt in weights])
        out_spec = pl.BlockSpec((1, c_out, tile_n), lambda b, i: (b, 0, i))
        return in_specs, out_spec

    def run(single_buffer_weights):
        in_specs, out_spec = make_specs(single_buffer_weights)
        return pl.pallas_call(
            _ocr_kernel,
            grid=(bs, n_tiles),
            in_specs=in_specs,
            out_specs=out_spec,
            out_shape=jax.ShapeDtypeStruct((bs, c_out, n_padded), jnp.bfloat16),
            compiler_params=pltpu.CompilerParams(
                dimension_semantics=("parallel", "parallel"),
                vmem_limit_bytes=_vmem_limit_bytes()),
        )(x, k, v, *weights)

    try:
        out = run(True)
    except Exception:
        # jax version without BlockSpec pipeline_mode: default double-buffered
        # weight blocks (identical results, slightly more VMEM).
        out = run(False)

    # Drop padded pixel columns, reshape back to NCHW (no transpose).
    out = out[:, :, :n_pix]
    return out.reshape(bs, c_out, h, w)


# ----------------------------------------------------------------------------
# Deterministic parameter construction (synthetic, no checkpoint)
# ----------------------------------------------------------------------------
def make_params(key, in_channels, key_channels, out_channels):
    def conv_bn(key, cin, cout):
        ks = jax.random.split(key, 6)
        W = 0.2 * jax.random.normal(ks[0], (cout, cin), jnp.float32)
        b = 0.1 * jax.random.normal(ks[1], (cout,), jnp.float32)
        gamma = 1.0 + 0.1 * jax.random.normal(ks[2], (cout,), jnp.float32)
        beta = 0.1 * jax.random.normal(ks[3], (cout,), jnp.float32)
        mean = 0.1 * jax.random.normal(ks[4], (cout,), jnp.float32)
        var = jnp.abs(1.0 + 0.1 * jax.random.normal(ks[5], (cout,), jnp.float32))
        return fold_conv_bn(W, b, gamma, beta, mean, var)

    keys = jax.random.split(key, 8)
    p = {}
    p["wp1"], p["bp1"] = conv_bn(keys[0], in_channels, key_channels)
    p["wp2"], p["bp2"] = conv_bn(keys[1], key_channels, key_channels)
    p["wo1"], p["bo1"] = conv_bn(keys[2], in_channels, key_channels)
    p["wo2"], p["bo2"] = conv_bn(keys[3], key_channels, key_channels)
    p["wd"], p["bd"] = conv_bn(keys[4], in_channels, key_channels)
    p["wu"], p["bu"] = conv_bn(keys[5], key_channels, in_channels)
    # final conv over concat([context, feats]) -> split into two weights
    wf, bf = conv_bn(keys[6], 2 * in_channels, out_channels)   # (C_out, 2*C_in)
    p["wfc"] = wf[:, :in_channels]
    p["wff"] = wf[:, in_channels:]
    p["bf"] = bf
    return p


# ----------------------------------------------------------------------------
# Pure-JAX f32 reference (for correctness check)
# ----------------------------------------------------------------------------
def reference_forward(feats, proxy_feats, params, key_channels):
    bs, c, h, w = feats.shape
    x = feats.reshape(bs, c, h * w)
    p = proxy_feats.reshape(bs, c, -1)

    def lr(wt, a, b):
        return jax.nn.relu(jnp.einsum("oc,bcn->bon", wt, a) + b[None])

    q = lr(params["wp2"], lr(params["wp1"], x, params["bp1"]), params["bp2"])
    k = lr(params["wo2"], lr(params["wo1"], p, params["bo1"]), params["bo2"])
    v = lr(params["wd"], p, params["bd"])
    sim = jnp.einsum("bkn,bkm->bnm", q, k) * (float(key_channels) ** -0.5)
    sm = jax.nn.softmax(sim, axis=-1)
    ctx = jnp.einsum("bnm,bkm->bkn", sm, v)
    ctx = lr(params["wu"], ctx, params["bu"])
    out = jax.nn.relu(jnp.einsum("oc,bcn->bon", params["wfc"], ctx)
                      + jnp.einsum("oc,bcn->bon", params["wff"], x)
                      + params["bf"][None])
    c_out = params["wfc"].shape[0]
    return out.reshape(bs, c_out, h, w)


if __name__ == "__main__":
    # Small shapes: batch=2, in_channels=16, key_channels=8, out_channels=16,
    # spatial 16x16, 8 proxy object regions (proxy is (bs, C, 8, 1)).
    # NOTE: at these toy sizes lanes/MXU are mostly padding -- benchmark at
    # production channel counts (C~512, K~256, N~16K), not here.
    bs, in_c, key_c, out_c, h, w, n_obj = 2, 16, 8, 16, 16, 16, 8

    root = jax.random.PRNGKey(0)
    k_feat, k_proxy, k_params = jax.random.split(root, 3)
    feats = jax.random.normal(k_feat, (bs, in_c, h, w), jnp.float32)
    proxy = jax.random.normal(k_proxy, (bs, in_c, n_obj, 1), jnp.float32)
    params = make_params(k_params, in_c, key_c, out_c)

    out = spatial_ocr_forward(feats, proxy, params, key_c, tile_n=1024)
    out = jax.block_until_ready(out)

    ref = jax.block_until_ready(reference_forward(feats, proxy, params, key_c))
    # bf16 matmul operands + bf16 output (f32 accumulation) vs f32 reference.
    np.testing.assert_allclose(np.asarray(out.astype(jnp.float32)),
                               np.asarray(ref), rtol=4e-2, atol=4e-2)
    print("KERNEL_OK")
</pallas_src>

<mosaic_0001>
module attributes {stable_mosaic.version = 11 : i64} {
  func.func @_ocr_kernel(%arg0: i32, %arg1: i32, %arg2: memref<1x16x256xbf16, #tpu.memory_space<vmem>>, %arg3: memref<1x8x8xbf16, #tpu.memory_space<vmem>>, %arg4: memref<1x8x8xbf16, #tpu.memory_space<vmem>>, %arg5: memref<8x16xbf16, #tpu.memory_space<vmem>>, %arg6: memref<8x1xf32, #tpu.memory_space<vmem>>, %arg7: memref<8x8xbf16, #tpu.memory_space<vmem>>, %arg8: memref<8x1xf32, #tpu.memory_space<vmem>>, %arg9: memref<16x8xbf16, #tpu.memory_space<vmem>>, %arg10: memref<16x1xf32, #tpu.memory_space<vmem>>, %arg11: memref<16x16xbf16, #tpu.memory_space<vmem>>, %arg12: memref<16x16xbf16, #tpu.memory_space<vmem>>, %arg13: memref<16x1xf32, #tpu.memory_space<vmem>>, %arg14: memref<1x16x256xbf16, #tpu.memory_space<vmem>>) attributes {dimension_semantics = [#tpu.dimension_semantics<parallel>, #tpu.dimension_semantics<parallel>], iteration_bounds = array<i64: 2, 1>, scalar_prefetch = 0 : i64, scratch_operands = 0 : i64, tpu.core_type = #tpu.core_type<tc>, window_params = [{transform_indices = @transform_0, window_bounds = array<i64: 1, 16, 256>}, {transform_indices = @transform_1, window_bounds = array<i64: 1, 8, 8>}, {transform_indices = @transform_2, window_bounds = array<i64: 1, 8, 8>}, {pipeline_mode = #tpu.pipeline_mode<synchronous>, transform_indices = @transform_3, window_bounds = array<i64: 8, 16>}, {pipeline_mode = #tpu.pipeline_mode<synchronous>, transform_indices = @transform_4, window_bounds = array<i64: 8, 1>}, {pipeline_mode = #tpu.pipeline_mode<synchronous>, transform_indices = @transform_5, window_bounds = array<i64: 8, 8>}, {pipeline_mode = #tpu.pipeline_mode<synchronous>, transform_indices = @transform_6, window_bounds = array<i64: 8, 1>}, {pipeline_mode = #tpu.pipeline_mode<synchronous>, transform_indices = @transform_7, window_bounds = array<i64: 16, 8>}, {pipeline_mode = #tpu.pipeline_mode<synchronous>, transform_indices = @transform_8, window_bounds = array<i64: 16, 1>}, {pipeline_mode = #tpu.pipeline_mode<synchronous>, transform_indices = @transform_9, window_bounds = array<i64: 16, 16>}, {pipeline_mode = #tpu.pipeline_mode<synchronous>, transform_indices = @transform_10, window_bounds = array<i64: 16, 16>}, {pipeline_mode = #tpu.pipeline_mode<synchronous>, transform_indices = @transform_11, window_bounds = array<i64: 16, 1>}, {transform_indices = @transform_12, window_bounds = array<i64: 1, 16, 256>}]} {
    %c0 = arith.constant 0 : index
    %c0_0 = arith.constant 0 : index
    %c0_1 = arith.constant 0 : index
    %0 = vector.load %arg2[%c0, %c0_0, %c0_1] : memref<1x16x256xbf16, #tpu.memory_space<vmem>>, vector<1x16x256xbf16>
    %1 = vector.shape_cast %0 : vector<1x16x256xbf16> to vector<16x256xbf16>
    %c0_2 = arith.constant 0 : index
    %c0_3 = arith.constant 0 : index
    %c0_4 = arith.constant 0 : index
    %2 = vector.load %arg3[%c0_2, %c0_3, %c0_4] : memref<1x8x8xbf16, #tpu.memory_space<vmem>>, vector<1x8x8xbf16>
    %3 = vector.shape_cast %2 : vector<1x8x8xbf16> to vector<8x8xbf16>
    %c0_5 = arith.constant 0 : index
    %c0_6 = arith.constant 0 : index
    %c0_7 = arith.constant 0 : index
    %4 = vector.load %arg4[%c0_5, %c0_6, %c0_7] : memref<1x8x8xbf16, #tpu.memory_space<vmem>>, vector<1x8x8xbf16>
    %5 = vector.shape_cast %4 : vector<1x8x8xbf16> to vector<8x8xbf16>
    %c0_8 = arith.constant 0 : index
    %c0_9 = arith.constant 0 : index
    %6 = vector.load %arg5[%c0_8, %c0_9] : memref<8x16xbf16, #tpu.memory_space<vmem>>, vector<8x16xbf16>
    %cst = arith.constant dense<0.000000e+00> : vector<8x256xf32>
    %7 = tpu.matmul %6, %1, %cst {dimension_numbers = #tpu.dot_dimension_numbers<[1], [0], [0], [1], [0, 0, 1, 1], [], []>} : vector<8x16xbf16>, vector<16x256xbf16>, vector<8x256xf32> -> vector<8x256xf32>
    %c0_10 = arith.constant 0 : index
    %c0_11 = arith.constant 0 : index
    %8 = vector.load %arg6[%c0_10, %c0_11] : memref<8x1xf32, #tpu.memory_space<vmem>>, vector<8x1xf32>
    %9 = vector.broadcast %8 : vector<8x1xf32> to vector<8x256xf32>
    %10 = arith.addf %7, %9 : vector<8x256xf32>
    %cst_12 = arith.constant 0.000000e+00 : f32
    %11 = vector.broadcast %cst_12 : f32 to vector<8x256xf32>
    %12 = arith.maximumf %10, %11 : vector<8x256xf32>
    %c0_13 = arith.constant 0 : index
    %c0_14 = arith.constant 0 : index
    %13 = vector.load %arg7[%c0_13, %c0_14] : memref<8x8xbf16, #tpu.memory_space<vmem>>, vector<8x8xbf16>
    %14 = arith.truncf %12 : vector<8x256xf32> to vector<8x256xbf16>
    %cst_15 = arith.constant dense<0.000000e+00> : vector<8x256xf32>
    %15 = tpu.matmul %13, %14, %cst_15 {dimension_numbers = #tpu.dot_dimension_numbers<[1], [0], [0], [1], [0, 0, 1, 1], [], []>} : vector<8x8xbf16>, vector<8x256xbf16>, vector<8x256xf32> -> vector<8x256xf32>
    %c0_16 = arith.constant 0 : index
    %c0_17 = arith.constant 0 : index
    %16 = vector.load %arg8[%c0_16, %c0_17] : memref<8x1xf32, #tpu.memory_space<vmem>>, vector<8x1xf32>
    %17 = vector.broadcast %16 : vector<8x1xf32> to vector<8x256xf32>
    %18 = arith.addf %15, %17 : vector<8x256xf32>
    %cst_18 = arith.constant 0.000000e+00 : f32
    %19 = vector.broadcast %cst_18 : f32 to vector<8x256xf32>
    %20 = arith.maximumf %18, %19 : vector<8x256xf32>
    %21 = arith.truncf %20 : vector<8x256xf32> to vector<8x256xbf16>
    %cst_19 = arith.constant dense<0.000000e+00> : vector<8x256xf32>
    %22 = tpu.matmul %3, %21, %cst_19 {dimension_numbers = #tpu.dot_dimension_numbers<[1], [0], [0], [1], [0, 0, 1, 1], [], []>} : vector<8x8xbf16>, vector<8x256xbf16>, vector<8x256xf32> -> vector<8x256xf32>
    %cst_20 = arith.constant dense<0xFF800000> : vector<256xf32>
    %23 = vector.multi_reduction <maximumf>, %22, %cst_20 [0] : vector<8x256xf32> to vector<256xf32>
    %24 = vector.shape_cast %23 : vector<256xf32> to vector<1x256xf32>
    %25 = vector.broadcast %24 : vector<1x256xf32> to vector<8x256xf32>
    %26 = arith.subf %22, %25 : vector<8x256xf32>
    %27 = math.exp %26 : vector<8x256xf32>
    %cst_21 = arith.constant dense<0.000000e+00> : vector<256xf32>
    %28 = vector.multi_reduction <add>, %27, %cst_21 [0] : vector<8x256xf32> to vector<256xf32>
    %29 = vector.shape_cast %28 : vector<256xf32> to vector<1x256xf32>
    %30 = tpu.reciprocal %29 {approx = true} : vector<1x256xf32> -> vector<1x256xf32>
    %31 = vector.broadcast %30 : vector<1x256xf32> to vector<8x256xf32>
    %32 = arith.mulf %27, %31 : vector<8x256xf32>
    %33 = arith.truncf %32 : vector<8x256xf32> to vector<8x256xbf16>
    %cst_22 = arith.constant dense<0.000000e+00> : vector<8x256xf32>
    %34 = tpu.matmul %5, %33, %cst_22 {dimension_numbers = #tpu.dot_dimension_numbers<[1], [0], [0], [1], [0, 0, 1, 1], [], []>} : vector<8x8xbf16>, vector<8x256xbf16>, vector<8x256xf32> -> vector<8x256xf32>
    %c0_23 = arith.constant 0 : index
    %c0_24 = arith.constant 0 : index
    %35 = vector.load %arg9[%c0_23, %c0_24] : memref<16x8xbf16, #tpu.memory_space<vmem>>, vector<16x8xbf16>
    %36 = arith.truncf %34 : vector<8x256xf32> to vector<8x256xbf16>
    %cst_25 = arith.constant dense<0.000000e+00> : vector<16x256xf32>
    %37 = tpu.matmul %35, %36, %cst_25 {dimension_numbers = #tpu.dot_dimension_numbers<[1], [0], [0], [1], [0, 0, 1, 1], [], []>} : vector<16x8xbf16>, vector<8x256xbf16>, vector<16x256xf32> -> vector<16x256xf32>
    %c0_26 = arith.constant 0 : index
    %c0_27 = arith.constant 0 : index
    %38 = vector.load %arg10[%c0_26, %c0_27] : memref<16x1xf32, #tpu.memory_space<vmem>>, vector<16x1xf32>
    %39 = vector.broadcast %38 : vector<16x1xf32> to vector<16x256xf32>
    %40 = arith.addf %37, %39 : vector<16x256xf32>
    %cst_28 = arith.constant 0.000000e+00 : f32
    %41 = vector.broadcast %cst_28 : f32 to vector<16x256xf32>
    %42 = arith.maximumf %40, %41 : vector<16x256xf32>
    %c0_29 = arith.constant 0 : index
    %c0_30 = arith.constant 0 : index
    %43 = vector.load %arg11[%c0_29, %c0_30] : memref<16x16xbf16, #tpu.memory_space<vmem>>, vector<16x16xbf16>
    %44 = arith.truncf %42 : vector<16x256xf32> to vector<16x256xbf16>
    %cst_31 = arith.constant dense<0.000000e+00> : vector<16x256xf32>
    %45 = tpu.matmul %43, %44, %cst_31 {dimension_numbers = #tpu.dot_dimension_numbers<[1], [0], [0], [1], [0, 0, 1, 1], [], []>} : vector<16x16xbf16>, vector<16x256xbf16>, vector<16x256xf32> -> vector<16x256xf32>
    %c0_32 = arith.constant 0 : index
    %c0_33 = arith.constant 0 : index
    %46 = vector.load %arg12[%c0_32, %c0_33] : memref<16x16xbf16, #tpu.memory_space<vmem>>, vector<16x16xbf16>
    %cst_34 = arith.constant dense<0.000000e+00> : vector<16x256xf32>
    %47 = tpu.matmul %46, %1, %cst_34 {dimension_numbers = #tpu.dot_dimension_numbers<[1], [0], [0], [1], [0, 0, 1, 1], [], []>} : vector<16x16xbf16>, vector<16x256xbf16>, vector<16x256xf32> -> vector<16x256xf32>
    %48 = arith.addf %45, %47 : vector<16x256xf32>
    %c0_35 = arith.constant 0 : index
    %c0_36 = arith.constant 0 : index
    %49 = vector.load %arg13[%c0_35, %c0_36] : memref<16x1xf32, #tpu.memory_space<vmem>>, vector<16x1xf32>
    %50 = vector.broadcast %49 : vector<16x1xf32> to vector<16x256xf32>
    %51 = arith.addf %48, %50 : vector<16x256xf32>
    %cst_37 = arith.constant 0.000000e+00 : f32
    %52 = vector.broadcast %cst_37 : f32 to vector<16x256xf32>
    %53 = arith.maximumf %51, %52 : vector<16x256xf32>
    %54 = arith.truncf %53 : vector<16x256xf32> to vector<16x256xbf16>
    %c0_38 = arith.constant 0 : index
    %c0_39 = arith.constant 0 : index
    %c0_40 = arith.constant 0 : index
    %55 = vector.load %arg14[%c0_38, %c0_39, %c0_40] : memref<1x16x256xbf16, #tpu.memory_space<vmem>>, vector<1x16x256xbf16>
    %56 = vector.shape_cast %55 : vector<1x16x256xbf16> to vector<16x256xbf16>
    %57 = vector.shape_cast %54 : vector<16x256xbf16> to vector<1x16x256xbf16>
    tpu.vector_store %arg14[%c0_38, %c0_39, %c0_40], %57 {strides = array<i32>} : memref<1x16x256xbf16, #tpu.memory_space<vmem>>, vector<1x16x256xbf16>,
    return
  }
  func.func @transform_0(%arg0: i32, %arg1: i32) -> (i32, i32, i32) {
    %c0_i32 = arith.constant 0 : i32
    %c0_i32_0 = arith.constant 0 : i32
    return %arg0, %c0_i32, %arg1 : i32, i32, i32
  }
  func.func @transform_1(%arg0: i32, %arg1: i32) -> (i32, i32, i32) {
    %c0_i32 = arith.constant 0 : i32
    %c0_i32_0 = arith.constant 0 : i32
    %c0_i32_1 = arith.constant 0 : i32
    return %arg0, %c0_i32, %c0_i32_0 : i32, i32, i32
  }
  func.func @transform_2(%arg0: i32, %arg1: i32) -> (i32, i32, i32) {
    %c0_i32 = arith.constant 0 : i32
    %c0_i32_0 = arith.constant 0 : i32
    %c0_i32_1 = arith.constant 0 : i32
    return %arg0, %c0_i32, %c0_i32_0 : i32, i32, i32
  }
  func.func @transform_3(%arg0: i32, %arg1: i32) -> (i32, i32) {
    %c0_i32 = arith.constant 0 : i32
    %c0_i32_0 = arith.constant 0 : i32
    %c0_i32_1 = arith.constant 0 : i32
    return %c0_i32, %c0_i32_0 : i32, i32
  }
  func.func @transform_4(%arg0: i32, %arg1: i32) -> (i32, i32) {
    %c0_i32 = arith.constant 0 : i32
    %c0_i32_0 = arith.constant 0 : i32
    %c0_i32_1 = arith.constant 0 : i32
    return %c0_i32, %c0_i32_0 : i32, i32
  }
  func.func @transform_5(%arg0: i32, %arg1: i32) -> (i32, i32) {
    %c0_i32 = arith.constant 0 : i32
    %c0_i32_0 = arith.constant 0 : i32
    %c0_i32_1 = arith.constant 0 : i32
    return %c0_i32, %c0_i32_0 : i32, i32
  }
  func.func @transform_6(%arg0: i32, %arg1: i32) -> (i32, i32) {
    %c0_i32 = arith.constant 0 : i32
    %c0_i32_0 = arith.constant 0 : i32
    %c0_i32_1 = arith.constant 0 : i32
    return %c0_i32, %c0_i32_0 : i32, i32
  }
  func.func @transform_7(%arg0: i32, %arg1: i32) -> (i32, i32) {
    %c0_i32 = arith.constant 0 : i32
    %c0_i32_0 = arith.constant 0 : i32
    %c0_i32_1 = arith.constant 0 : i32
    return %c0_i32, %c0_i32_0 : i32, i32
  }
  func.func @transform_8(%arg0: i32, %arg1: i32) -> (i32, i32) {
    %c0_i32 = arith.constant 0 : i32
    %c0_i32_0 = arith.constant 0 : i32
    %c0_i32_1 = arith.constant 0 : i32
    return %c0_i32, %c0_i32_0 : i32, i32
  }
  func.func @transform_9(%arg0: i32, %arg1: i32) -> (i32, i32) {
    %c0_i32 = arith.constant 0 : i32
    %c0_i32_0 = arith.constant 0 : i32
    %c0_i32_1 = arith.constant 0 : i32
    return %c0_i32, %c0_i32_0 : i32, i32
  }
  func.func @transform_10(%arg0: i32, %arg1: i32) -> (i32, i32) {
    %c0_i32 = arith.constant 0 : i32
    %c0_i32_0 = arith.constant 0 : i32
    %c0_i32_1 = arith.constant 0 : i32
    return %c0_i32, %c0_i32_0 : i32, i32
  }
  func.func @transform_11(%arg0: i32, %arg1: i32) -> (i32, i32) {
    %c0_i32 = arith.constant 0 : i32
    %c0_i32_0 = arith.constant 0 : i32
    %c0_i32_1 = arith.constant 0 : i32
    return %c0_i32, %c0_i32_0 : i32, i32
  }
  func.func @transform_12(%arg0: i32, %arg1: i32) -> (i32, i32, i32) {
    %c0_i32 = arith.constant 0 : i32
    %c0_i32_0 = arith.constant 0 : i32
    return %arg0, %c0_i32, %arg1 : i32, i32, i32
  }
}

module attributes {stable_mosaic.version = 11 : i64} {
  func.func @_ocr_kernel(%arg0: i32, %arg1: i32, %arg2: memref<1x16x256xbf16, #tpu.memory_space<vmem>>, %arg3: memref<1x8x8xbf16, #tpu.memory_space<vmem>>, %arg4: memref<1x8x8xbf16, #tpu.memory_space<vmem>>, %arg5: memref<8x16xbf16, #tpu.memory_space<vmem>>, %arg6: memref<8x1xf32, #tpu.memory_space<vmem>>, %arg7: memref<8x8xbf16, #tpu.memory_space<vmem>>, %arg8: memref<8x1xf32, #tpu.memory_space<vmem>>, %arg9: memref<16x8xbf16, #tpu.memory_space<vmem>>, %arg10: memref<16x1xf32, #tpu.memory_space<vmem>>, %arg11: memref<16x16xbf16, #tpu.memory_space<vmem>>, %arg12: memref<16x16xbf16, #tpu.memory_space<vmem>>, %arg13: memref<16x1xf32, #tpu.memory_space<vmem>>, %arg14: memref<1x16x256xbf16, #tpu.memory_space<vmem>>) attributes {dimension_semantics = [#tpu.dimension_semantics<parallel>, #tpu.dimension_semantics<parallel>], iteration_bounds = array<i64: 2, 1>, scalar_prefetch = 0 : i64, scratch_operands = 0 : i64, tpu.core_type = #tpu.core_type<tc>, window_params = [{transform_indices = @transform_0, window_bounds = array<i64: 1, 16, 256>}, {transform_indices = @transform_1, window_bounds = array<i64: 1, 8, 8>}, {transform_indices = @transform_2, window_bounds = array<i64: 1, 8, 8>}, {pipeline_mode = #tpu.pipeline_mode<synchronous>, transform_indices = @transform_3, window_bounds = array<i64: 8, 16>}, {pipeline_mode = #tpu.pipeline_mode<synchronous>, transform_indices = @transform_4, window_bounds = array<i64: 8, 1>}, {pipeline_mode = #tpu.pipeline_mode<synchronous>, transform_indices = @transform_5, window_bounds = array<i64: 8, 8>}, {pipeline_mode = #tpu.pipeline_mode<synchronous>, transform_indices = @transform_6, window_bounds = array<i64: 8, 1>}, {pipeline_mode = #tpu.pipeline_mode<synchronous>, transform_indices = @transform_7, window_bounds = array<i64: 16, 8>}, {pipeline_mode = #tpu.pipeline_mode<synchronous>, transform_indices = @transform_8, window_bounds = array<i64: 16, 1>}, {pipeline_mode = #tpu.pipeline_mode<synchronous>, transform_indices = @transform_9, window_bounds = array<i64: 16, 16>}, {pipeline_mode = #tpu.pipeline_mode<synchronous>, transform_indices = @transform_10, window_bounds = array<i64: 16, 16>}, {pipeline_mode = #tpu.pipeline_mode<synchronous>, transform_indices = @transform_11, window_bounds = array<i64: 16, 1>}, {transform_indices = @transform_12, window_bounds = array<i64: 1, 16, 256>}]} {
    %c0 = arith.constant 0 : index
    %c0_0 = arith.constant 0 : index
    %c0_1 = arith.constant 0 : index
    %0 = vector.load %arg2[%c0, %c0_0, %c0_1] : memref<1x16x256xbf16, #tpu.memory_space<vmem>>, vector<1x16x256xbf16>
    %1 = vector.shape_cast %0 : vector<1x16x256xbf16> to vector<16x256xbf16>
    %c0_2 = arith.constant 0 : index
    %c0_3 = arith.constant 0 : index
    %c0_4 = arith.constant 0 : index
    %2 = vector.load %arg3[%c0_2, %c0_3, %c0_4] : memref<1x8x8xbf16, #tpu.memory_space<vmem>>, vector<1x8x8xbf16>
    %3 = vector.shape_cast %2 : vector<1x8x8xbf16> to vector<8x8xbf16>
    %c0_5 = arith.constant 0 : index
    %c0_6 = arith.constant 0 : index
    %c0_7 = arith.constant 0 : index
    %4 = vector.load %arg4[%c0_5, %c0_6, %c0_7] : memref<1x8x8xbf16, #tpu.memory_space<vmem>>, vector<1x8x8xbf16>
    %5 = vector.shape_cast %4 : vector<1x8x8xbf16> to vector<8x8xbf16>
    %c0_8 = arith.constant 0 : index
    %c0_9 = arith.constant 0 : index
    %6 = vector.load %arg5[%c0_8, %c0_9] : memref<8x16xbf16, #tpu.memory_space<vmem>>, vector<8x16xbf16>
    %cst = arith.constant dense<0.000000e+00> : vector<8x256xf32>
    %7 = tpu.matmul %6, %1, %cst {dimension_numbers = #tpu.dot_dimension_numbers<[1], [0], [0], [1], [0, 0, 1, 1], [], []>} : vector<8x16xbf16>, vector<16x256xbf16>, vector<8x256xf32> -> vector<8x256xf32>
    %c0_10 = arith.constant 0 : index
    %c0_11 = arith.constant 0 : index
    %8 = vector.load %arg6[%c0_10, %c0_11] : memref<8x1xf32, #tpu.memory_space<vmem>>, vector<8x1xf32>
    %9 = vector.broadcast %8 : vector<8x1xf32> to vector<8x256xf32>
    %10 = arith.addf %7, %9 : vector<8x256xf32>
    %cst_12 = arith.constant 0.000000e+00 : f32
    %11 = vector.broadcast %cst_12 : f32 to vector<8x256xf32>
    %12 = arith.maximumf %10, %11 : vector<8x256xf32>
    %c0_13 = arith.constant 0 : index
    %c0_14 = arith.constant 0 : index
    %13 = vector.load %arg7[%c0_13, %c0_14] : memref<8x8xbf16, #tpu.memory_space<vmem>>, vector<8x8xbf16>
    %14 = arith.truncf %12 : vector<8x256xf32> to vector<8x256xbf16>
    %cst_15 = arith.constant dense<0.000000e+00> : vector<8x256xf32>
    %15 = tpu.matmul %13, %14, %cst_15 {dimension_numbers = #tpu.dot_dimension_numbers<[1], [0], [0], [1], [0, 0, 1, 1], [], []>} : vector<8x8xbf16>, vector<8x256xbf16>, vector<8x256xf32> -> vector<8x256xf32>
    %c0_16 = arith.constant 0 : index
    %c0_17 = arith.constant 0 : index
    %16 = vector.load %arg8[%c0_16, %c0_17] : memref<8x1xf32, #tpu.memory_space<vmem>>, vector<8x1xf32>
    %17 = vector.broadcast %16 : vector<8x1xf32> to vector<8x256xf32>
    %18 = arith.addf %15, %17 : vector<8x256xf32>
    %cst_18 = arith.constant 0.000000e+00 : f32
    %19 = vector.broadcast %cst_18 : f32 to vector<8x256xf32>
    %20 = arith.maximumf %18, %19 : vector<8x256xf32>
    %21 = arith.truncf %20 : vector<8x256xf32> to vector<8x256xbf16>
    %cst_19 = arith.constant dense<0.000000e+00> : vector<8x256xf32>
    %22 = tpu.matmul %3, %21, %cst_19 {dimension_numbers = #tpu.dot_dimension_numbers<[1], [0], [0], [1], [0, 0, 1, 1], [], []>} : vector<8x8xbf16>, vector<8x256xbf16>, vector<8x256xf32> -> vector<8x256xf32>
    %cst_20 = arith.constant dense<0xFF800000> : vector<256xf32>
    %23 = vector.multi_reduction <maximumf>, %22, %cst_20 [0] : vector<8x256xf32> to vector<256xf32>
    %24 = vector.shape_cast %23 : vector<256xf32> to vector<1x256xf32>
    %25 = vector.broadcast %24 : vector<1x256xf32> to vector<8x256xf32>
    %26 = arith.subf %22, %25 : vector<8x256xf32>
    %27 = math.exp %26 : vector<8x256xf32>
    %cst_21 = arith.constant dense<0.000000e+00> : vector<256xf32>
    %28 = vector.multi_reduction <add>, %27, %cst_21 [0] : vector<8x256xf32> to vector<256xf32>
    %29 = vector.shape_cast %28 : vector<256xf32> to vector<1x256xf32>
    %30 = tpu.reciprocal %29 {approx = true} : vector<1x256xf32> -> vector<1x256xf32>
    %31 = vector.broadcast %30 : vector<1x256xf32> to vector<8x256xf32>
    %32 = arith.mulf %27, %31 : vector<8x256xf32>
    %33 = arith.truncf %32 : vector<8x256xf32> to vector<8x256xbf16>
    %cst_22 = arith.constant dense<0.000000e+00> : vector<8x256xf32>
    %34 = tpu.matmul %5, %33, %cst_22 {dimension_numbers = #tpu.dot_dimension_numbers<[1], [0], [0], [1], [0, 0, 1, 1], [], []>} : vector<8x8xbf16>, vector<8x256xbf16>, vector<8x256xf32> -> vector<8x256xf32>
    %c0_23 = arith.constant 0 : index
    %c0_24 = arith.constant 0 : index
    %35 = vector.load %arg9[%c0_23, %c0_24] : memref<16x8xbf16, #tpu.memory_space<vmem>>, vector<16x8xbf16>
    %36 = arith.truncf %34 : vector<8x256xf32> to vector<8x256xbf16>
    %cst_25 = arith.constant dense<0.000000e+00> : vector<16x256xf32>
    %37 = tpu.matmul %35, %36, %cst_25 {dimension_numbers = #tpu.dot_dimension_numbers<[1], [0], [0], [1], [0, 0, 1, 1], [], []>} : vector<16x8xbf16>, vector<8x256xbf16>, vector<16x256xf32> -> vector<16x256xf32>
    %c0_26 = arith.constant 0 : index
    %c0_27 = arith.constant 0 : index
    %38 = vector.load %arg10[%c0_26, %c0_27] : memref<16x1xf32, #tpu.memory_space<vmem>>, vector<16x1xf32>
    %39 = vector.broadcast %38 : vector<16x1xf32> to vector<16x256xf32>
    %40 = arith.addf %37, %39 : vector<16x256xf32>
    %cst_28 = arith.constant 0.000000e+00 : f32
    %41 = vector.broadcast %cst_28 : f32 to vector<16x256xf32>
    %42 = arith.maximumf %40, %41 : vector<16x256xf32>
    %c0_29 = arith.constant 0 : index
    %c0_30 = arith.constant 0 : index
    %43 = vector.load %arg11[%c0_29, %c0_30] : memref<16x16xbf16, #tpu.memory_space<vmem>>, vector<16x16xbf16>
    %44 = arith.truncf %42 : vector<16x256xf32> to vector<16x256xbf16>
    %cst_31 = arith.constant dense<0.000000e+00> : vector<16x256xf32>
    %45 = tpu.matmul %43, %44, %cst_31 {dimension_numbers = #tpu.dot_dimension_numbers<[1], [0], [0], [1], [0, 0, 1, 1], [], []>} : vector<16x16xbf16>, vector<16x256xbf16>, vector<16x256xf32> -> vector<16x256xf32>
    %c0_32 = arith.constant 0 : index
    %c0_33 = arith.constant 0 : index
    %46 = vector.load %arg12[%c0_32, %c0_33] : memref<16x16xbf16, #tpu.memory_space<vmem>>, vector<16x16xbf16>
    %cst_34 = arith.constant dense<0.000000e+00> : vector<16x256xf32>
    %47 = tpu.matmul %46, %1, %cst_34 {dimension_numbers = #tpu.dot_dimension_numbers<[1], [0], [0], [1], [0, 0, 1, 1], [], []>} : vector<16x16xbf16>, vector<16x256xbf16>, vector<16x256xf32> -> vector<16x256xf32>
    %48 = arith.addf %45, %47 : vector<16x256xf32>
    %c0_35 = arith.constant 0 : index
    %c0_36 = arith.constant 0 : index
    %49 = vector.load %arg13[%c0_35, %c0_36] : memref<16x1xf32, #tpu.memory_space<vmem>>, vector<16x1xf32>
    %50 = vector.broadcast %49 : vector<16x1xf32> to vector<16x256xf32>
    %51 = arith.addf %48, %50 : vector<16x256xf32>
    %cst_37 = arith.constant 0.000000e+00 : f32
    %52 = vector.broadcast %cst_37 : f32 to vector<16x256xf32>
    %53 = arith.maximumf %51, %52 : vector<16x256xf32>
    %54 = arith.truncf %53 : vector<16x256xf32> to vector<16x256xbf16>
    %c0_38 = arith.constant 0 : index
    %c0_39 = arith.constant 0 : index
    %c0_40 = arith.constant 0 : index
    %55 = vector.load %arg14[%c0_38, %c0_39, %c0_40] : memref<1x16x256xbf16, #tpu.memory_space<vmem>>, vector<1x16x256xbf16>
    %56 = vector.shape_cast %55 : vector<1x16x256xbf16> to vector<16x256xbf16>
    %57 = vector.shape_cast %54 : vector<16x256xbf16> to vector<1x16x256xbf16>
    tpu.vector_store %arg14[%c0_38, %c0_39, %c0_40], %57 {strides = array<i32>} : memref<1x16x256xbf16, #tpu.memory_space<vmem>>, vector<1x16x256xbf16>,
    return
  }
  func.func @transform_0(%arg0: i32, %arg1: i32) -> (i32, i32, i32) {
    %c0_i32 = arith.constant 0 : i32
    %c0_i32_0 = arith.constant 0 : i32
    return %arg0, %c0_i32, %arg1 : i32, i32, i32
  }
  func.func @transform_1(%arg0: i32, %arg1: i32) -> (i32, i32, i32) {
    %c0_i32 = arith.constant 0 : i32
    %c0_i32_0 = arith.constant 0 : i32
    %c0_i32_1 = arith.constant 0 : i32
    return %arg0, %c0_i32, %c0_i32_0 : i32, i32, i32
  }
  func.func @transform_2(%arg0: i32, %arg1: i32) -> (i32, i32, i32) {
    %c0_i32 = arith.constant 0 : i32
    %c0_i32_0 = arith.constant 0 : i32
    %c0_i32_1 = arith.constant 0 : i32
    return %arg0, %c0_i32, %c0_i32_0 : i32, i32, i32
  }
  func.func @transform_3(%arg0: i32, %arg1: i32) -> (i32, i32) {
    %c0_i32 = arith.constant 0 : i32
    %c0_i32_0 = arith.constant 0 : i32
    %c0_i32_1 = arith.constant 0 : i32
    return %c0_i32, %c0_i32_0 : i32, i32
  }
  func.func @transform_4(%arg0: i32, %arg1: i32) -> (i32, i32) {
    %c0_i32 = arith.constant 0 : i32
    %c0_i32_0 = arith.constant 0 : i32
    %c0_i32_1 = arith.constant 0 : i32
    return %c0_i32, %c0_i32_0 : i32, i32
  }
  func.func @transform_5(%arg0: i32, %arg1: i32) -> (i32, i32) {
    %c0_i32 = arith.constant 0 : i32
    %c0_i32_0 = arith.constant 0 : i32
    %c0_i32_1 = arith.constant 0 : i32
    return %c0_i32, %c0_i32_0 : i32, i32
  }
  func.func @transform_6(%arg0: i32, %arg1: i32) -> (i32, i32) {
    %c0_i32 = arith.constant 0 : i32
    %c0_i32_0 = arith.constant 0 : i32
    %c0_i32_1 = arith.constant 0 : i32
    return %c0_i32, %c0_i32_0 : i32, i32
  }
  func.func @transform_7(%arg0: i32, %arg1: i32) -> (i32, i32) {
    %c0_i32 = arith.constant 0 : i32
    %c0_i32_0 = arith.constant 0 : i32
    %c0_i32_1 = arith.constant 0 : i32
    return %c0_i32, %c0_i32_0 : i32, i32
  }
  func.func @transform_8(%arg0: i32, %arg1: i32) -> (i32, i32) {
    %c0_i32 = arith.constant 0 : i32
    %c0_i32_0 = arith.constant 0 : i32
    %c0_i32_1 = arith.constant 0 : i32
    return %c0_i32, %c0_i32_0 : i32, i32
  }
  func.func @transform_9(%arg0: i32, %arg1: i32) -> (i32, i32) {
    %c0_i32 = arith.constant 0 : i32
    %c0_i32_0 = arith.constant 0 : i32
    %c0_i32_1 = arith.constant 0 : i32
    return %c0_i32, %c0_i32_0 : i32, i32
  }
  func.func @transform_10(%arg0: i32, %arg1: i32) -> (i32, i32) {
    %c0_i32 = arith.constant 0 : i32
    %c0_i32_0 = arith.constant 0 : i32
    %c0_i32_1 = arith.constant 0 : i32
    return %c0_i32, %c0_i32_0 : i32, i32
  }
  func.func @transform_11(%arg0: i32, %arg1: i32) -> (i32, i32) {
    %c0_i32 = arith.constant 0 : i32
    %c0_i32_0 = arith.constant 0 : i32
    %c0_i32_1 = arith.constant 0 : i32
    return %c0_i32, %c0_i32_0 : i32, i32
  }
  func.func @transform_12(%arg0: i32, %arg1: i32) -> (i32, i32, i32) {
    %c0_i32 = arith.constant 0 : i32
    %c0_i32_0 = arith.constant 0 : i32
    return %arg0, %c0_i32, %arg1 : i32, i32, i32
  }
}

</mosaic_0001>

<llo_original>
// kernel: tpu_custom_call.1
$region0: #{tpu_custom_call.1}
  #allocation0 [shape = 'u32[]', space=smem, size = 0x4, offset = 0x4, fixed_abs, tag = 'smem constant byte address 0x4 - core index']
  #allocation1 [shape = 'u32[144,128]{1,0:T(1,128)}', space=vmem, size = 0x12000, scoped, tag = 'internal scratch']
  %s0 = inlined_call_operand.vmem [shape: bf16[2,16,256], index: 0, kind: input, shape index: {}]
  %s1 = inlined_call_operand.vmem [shape: bf16[2,8,8], index: 1, kind: input, shape index: {}]
  %s2 = inlined_call_operand.vmem [shape: bf16[2,8,8], index: 2, kind: input, shape index: {}]
  %s3 = inlined_call_operand.vmem [shape: bf16[8,16], index: 3, kind: input, shape index: {}]
  %s4 = inlined_call_operand.vmem [shape: f32[8,1], index: 4, kind: input, shape index: {}]
  %s5 = inlined_call_operand.vmem [shape: bf16[8,8], index: 5, kind: input, shape index: {}]
  %s6 = inlined_call_operand.vmem [shape: f32[8,1], index: 6, kind: input, shape index: {}]
  %s7 = inlined_call_operand.vmem [shape: bf16[16,8], index: 7, kind: input, shape index: {}]
  %s8 = inlined_call_operand.vmem [shape: f32[16,1], index: 8, kind: input, shape index: {}]
  %s9 = inlined_call_operand.vmem [shape: bf16[16,16], index: 9, kind: input, shape index: {}]
  %s10 = inlined_call_operand.vmem [shape: bf16[16,16], index: 10, kind: input, shape index: {}]
  %s11 = inlined_call_operand.vmem [shape: f32[16,1], index: 11, kind: input, shape index: {}]
  %s12 = inlined_call_operand.hbm [shape: bf16[2,16,256], index: 12, kind: output, shape index: {}]
  %s13 = sld [smem:[#allocation0]]
  $region81: #{tpu_custom_call.1} parent=0
    _
  %s15 = ssub.s32 1, %s13
  %s16 = scalar_select 0, %s15, %s13
  $region1: #{tpu_custom_call.1} parent=0
    #allocation2 [shape = 'u8[16384]{0}', space=vmem, size = 0x4000, scoped, tag = 'output window, operand 0']
    #allocation3 [shape = 's32[2]{0}', space=sflag, size = 0x8, scoped, tag = 'scoped memory for tpu_custom_call.1']
    %17 = vsyncpa [#allocation3], 0
    %s18 = scalar_lea.sflag [#allocation3], 1
    %19 = vsyncpa %s18, 0
    loop: start=0, step=1, limit=4
    $region2: #{tpu_custom_call.1} parent=1 // loop_pre_header
      _
    $region3: #{tpu_custom_call.1} parent=1 // loop_header
      %s21 = sphi 0, %s25
      %p22 = scmp.ge.s32.totalorder %s21, 4
      %s28 = sphi 0, %s40
      %s29 = sphi 0, %s36
      %s30 = sphi 0, %s28
      %s31 = sphi 0, %s29
      %s32 = sphi 0, %s30
      %s33 = sphi 0, %s31
      %s45 = sphi 0, %s47
      %s48 = sphi 0, %s45
      %s49 = sphi 0, %s48
      %s65 = sphi 0, %s49
      %s71 = sphi 0, %s73
      %s74 = sphi 0, %s71
      %s75 = sphi 0, %s74
      %s91 = sphi 0, %s75
      %s97 = sphi 0, %s99
      %s100 = sphi 0, %s97
      %s101 = sphi 0, %s100
      %s117 = sphi 0, %s101
      %s121 = sphi 0, %s121
      %s123 = sphi 0, %s121
      %s124 = sphi 0, %s123
      %s138 = sphi 0, %s124
      %s142 = sphi 0, %s142
      %s144 = sphi 0, %s142
      %s145 = sphi 0, %s144
      %s159 = sphi 0, %s145
      %s163 = sphi 0, %s163
      %s165 = sphi 0, %s163
      %s166 = sphi 0, %s165
      %s180 = sphi 0, %s166
      %s184 = sphi 0, %s184
      %s186 = sphi 0, %s184
      %s187 = sphi 0, %s186
      %s201 = sphi 0, %s187
      %s205 = sphi 0, %s205
      %s207 = sphi 0, %s205
      %s208 = sphi 0, %s207
      %s222 = sphi 0, %s208
      %s226 = sphi 0, %s226
      %s228 = sphi 0, %s226
      %s229 = sphi 0, %s228
      %s243 = sphi 0, %s229
      %s247 = sphi 0, %s247
      %s249 = sphi 0, %s247
      %s250 = sphi 0, %s249
      %s264 = sphi 0, %s250
      %s268 = sphi 0, %s268
      %s270 = sphi 0, %s268
      %s271 = sphi 0, %s270
      %s285 = sphi 0, %s271
      %s289 = sphi 0, %s289
      %s291 = sphi 0, %s289
      %s292 = sphi 0, %s291
      %s306 = sphi 0, %s292
      %s314 = sphi 0, %s316
      %s317 = sphi 0, %s314
      %s318 = sphi 0, %s317
      %s334 = sphi 0, %s318
    $region4: #{tpu_custom_call.1} parent=1 // loop_header_branch
      %24 = sbr.rel (%p22) target = $region8
    $region5: #{tpu_custom_call.1} parent=1 // loop_body
      %s26 = ssub.s32 %s21, 1
      %s27 = ssub.s32 %s21, 2
      %s34 = sadd.s32 1, %s29
      %p35 = scmp.ge.s32.totalorder %s34, 1
      %s36 = scalar_select %p35, 0, %s34
      %s37 = sadd.s32 1, %s28
      %s38 = scalar_select %p35, %s37, %s28
      %p39 = scmp.ge.s32.totalorder %s38, 2
      %s40 = scalar_select %p39, 0, %s38
      %s41 = ssub.s32 %s28, %s40
      %s42 = ssub.s32 %s29, %s36
      %s43 = sor.u32 %s41, %s42
      %p44 = scmp.eq.s32.totalorder %s43, 0
      %s46 = sadd.s32 %s45, 1
      %s47 = scalar_select %p44, %s45, %s46
      %p50 = pneg %p44
      %p51 = scmp.eq.s32.totalorder %s21, 1
      %p52 = por %p50, %p51
      %p53 = scmp.ne.s32.totalorder %s45, %s48
      %p54 = scmp.eq.s32.totalorder %s21, 0
      %p55 = por %p53, %p54
      %p56 = scmp.ne.s32.totalorder %s45, %s48
      %p57 = scmp.eq.s32.totalorder %s26, 1
      %p58 = por %p56, %p57
      %p59 = scmp.ne.s32.totalorder %s48, %s49
      %p60 = scmp.eq.s32.totalorder %s26, 0
      %p61 = por %p59, %p60
      %p62 = scmp.ne.s32.totalorder %s48, %s49
      %p63 = scmp.eq.s32.totalorder %s27, 1
      %p64 = por %p62, %p63
      %p66 = scmp.ne.s32.totalorder %s49, %s65
      %p67 = scmp.eq.s32.totalorder %s27, 0
      %p68 = por %p66, %p67
      %s69 = ssub.s32 %s28, %s40
      %p70 = scmp.eq.s32.totalorder %s69, 0
      %s72 = sadd.s32 %s71, 1
      %s73 = scalar_select %p70, %s71, %s72
      %p76 = pneg %p70
      %p77 = scmp.eq.s32.totalorder %s21, 1
      %p78 = por %p76, %p77
      %p79 = scmp.ne.s32.totalorder %s71, %s74
      %p80 = scmp.eq.s32.totalorder %s21, 0
      %p81 = por %p79, %p80
      %p82 = scmp.ne.s32.totalorder %s71, %s74
      %p83 = scmp.eq.s32.totalorder %s26, 1
      %p84 = por %p82, %p83
      %p85 = scmp.ne.s32.totalorder %s74, %s75
      %p86 = scmp.eq.s32.totalorder %s26, 0
      %p87 = por %p85, %p86
      %p88 = scmp.ne.s32.totalorder %s74, %s75
      %p89 = scmp.eq.s32.totalorder %s27, 1
      %p90 = por %p88, %p89
      %p92 = scmp.ne.s32.totalorder %s75, %s91
      %p93 = scmp.eq.s32.totalorder %s27, 0
      %p94 = por %p92, %p93
      %s95 = ssub.s32 %s28, %s40
      %p96 = scmp.eq.s32.totalorder %s95, 0
      %s98 = sadd.s32 %s97, 1
      %s99 = scalar_select %p96, %s97, %s98
      %p102 = pneg %p96
      %p103 = scmp.eq.s32.totalorder %s21, 1
      %p104 = por %p102, %p103
      %p105 = scmp.ne.s32.totalorder %s97, %s100
      %p106 = scmp.eq.s32.totalorder %s21, 0
      %p107 = por %p105, %p106
      %p108 = scmp.ne.s32.totalorder %s97, %s100
      %p109 = scmp.eq.s32.totalorder %s26, 1
      %p110 = por %p108, %p109
      %p111 = scmp.ne.s32.totalorder %s100, %s101
      %p112 = scmp.eq.s32.totalorder %s26, 0
      %p113 = por %p111, %p112
      %p114 = scmp.ne.s32.totalorder %s100, %s101
      %p115 = scmp.eq.s32.totalorder %s27, 1
      %p116 = por %p114, %p115
      %p118 = scmp.ne.s32.totalorder %s101, %s117
      %p119 = scmp.eq.s32.totalorder %s27, 0
      %p120 = por %p118, %p119
      %s122 = sadd.s32 %s121, 1
      %p125 = scmp.eq.s32.totalorder %s21, 1
      %p126 = scmp.ne.s32.totalorder %s121, %s123
      %p127 = scmp.eq.s32.totalorder %s21, 0
      %p128 = por %p126, %p127
      %p129 = scmp.ne.s32.totalorder %s121, %s123
      %p130 = scmp.eq.s32.totalorder %s26, 1
      %p131 = por %p129, %p130
      %p132 = scmp.ne.s32.totalorder %s123, %s124
      %p133 = scmp.eq.s32.totalorder %s26, 0
      %p134 = por %p132, %p133
      %p135 = scmp.ne.s32.totalorder %s123, %s124
      %p136 = scmp.eq.s32.totalorder %s27, 1
      %p137 = por %p135, %p136
      %p139 = scmp.ne.s32.totalorder %s124, %s138
      %p140 = scmp.eq.s32.totalorder %s27, 0
      %p141 = por %p139, %p140
      %s143 = sadd.s32 %s142, 1
      %p146 = scmp.eq.s32.totalorder %s21, 1
      %p147 = scmp.ne.s32.totalorder %s142, %s144
      %p148 = scmp.eq.s32.totalorder %s21, 0
      %p149 = por %p147, %p148
      %p150 = scmp.ne.s32.totalorder %s142, %s144
      %p151 = scmp.eq.s32.totalorder %s26, 1
      %p152 = por %p150, %p151
      %p153 = scmp.ne.s32.totalorder %s144, %s145
      %p154 = scmp.eq.s32.totalorder %s26, 0
      %p155 = por %p153, %p154
      %p156 = scmp.ne.s32.totalorder %s144, %s145
      %p157 = scmp.eq.s32.totalorder %s27, 1
      %p158 = por %p156, %p157
      %p160 = scmp.ne.s32.totalorder %s145, %s159
      %p161 = scmp.eq.s32.totalorder %s27, 0
      %p162 = por %p160, %p161
      %s164 = sadd.s32 %s163, 1
      %p167 = scmp.eq.s32.totalorder %s21, 1
      %p168 = scmp.ne.s32.totalorder %s163, %s165
      %p169 = scmp.eq.s32.totalorder %s21, 0
      %p170 = por %p168, %p169
      %p171 = scmp.ne.s32.totalorder %s163, %s165
      %p172 = scmp.eq.s32.totalorder %s26, 1
      %p173 = por %p171, %p172
      %p174 = scmp.ne.s32.totalorder %s165, %s166
      %p175 = scmp.eq.s32.totalorder %s26, 0
      %p176 = por %p174, %p175
      %p177 = scmp.ne.s32.totalorder %s165, %s166
      %p178 = scmp.eq.s32.totalorder %s27, 1
      %p179 = por %p177, %p178
      %p181 = scmp.ne.s32.totalorder %s166, %s180
      %p182 = scmp.eq.s32.totalorder %s27, 0
      %p183 = por %p181, %p182
      %s185 = sadd.s32 %s184, 1
      %p188 = scmp.eq.s32.totalorder %s21, 1
      %p189 = scmp.ne.s32.totalorder %s184, %s186
      %p190 = scmp.eq.s32.totalorder %s21, 0
      %p191 = por %p189, %p190
      %p192 = scmp.ne.s32.totalorder %s184, %s186
      %p193 = scmp.eq.s32.totalorder %s26, 1
      %p194 = por %p192, %p193
      %p195 = scmp.ne.s32.totalorder %s186, %s187
      %p196 = scmp.eq.s32.totalorder %s26, 0
      %p197 = por %p195, %p196
      %p198 = scmp.ne.s32.totalorder %s186, %s187
      %p199 = scmp.eq.s32.totalorder %s27, 1
      %p200 = por %p198, %p199
      %p202 = scmp.ne.s32.totalorder %s187, %s201
      %p203 = scmp.eq.s32.totalorder %s27, 0
      %p204 = por %p202, %p203
      %s206 = sadd.s32 %s205, 1
      %p209 = scmp.eq.s32.totalorder %s21, 1
      %p210 = scmp.ne.s32.totalorder %s205, %s207
      %p211 = scmp.eq.s32.totalorder %s21, 0
      %p212 = por %p210, %p211
      %p213 = scmp.ne.s32.totalorder %s205, %s207
      %p214 = scmp.eq.s32.totalorder %s26, 1
      %p215 = por %p213, %p214
      %p216 = scmp.ne.s32.totalorder %s207, %s208
      %p217 = scmp.eq.s32.totalorder %s26, 0
      %p218 = por %p216, %p217
      %p219 = scmp.ne.s32.totalorder %s207, %s208
      %p220 = scmp.eq.s32.totalorder %s27, 1
      %p221 = por %p219, %p220
      %p223 = scmp.ne.s32.totalorder %s208, %s222
      %p224 = scmp.eq.s32.totalorder %s27, 0
      %p225 = por %p223, %p224
      %s227 = sadd.s32 %s226, 1
      %p230 = scmp.eq.s32.totalorder %s21, 1
      %p231 = scmp.ne.s32.totalorder %s226, %s228
      %p232 = scmp.eq.s32.totalorder %s21, 0
      %p233 = por %p231, %p232
      %p234 = scmp.ne.s32.totalorder %s226, %s228
      %p235 = scmp.eq.s32.totalorder %s26, 1
      %p236 = por %p234, %p235
      %p237 = scmp.ne.s32.totalorder %s228, %s229
      %p238 = scmp.eq.s32.totalorder %s26, 0
      %p239 = por %p237, %p238
      %p240 = scmp.ne.s32.totalorder %s228, %s229
      %p241 = scmp.eq.s32.totalorder %s27, 1
      %p242 = por %p240, %p241
      %p244 = scmp.ne.s32.totalorder %s229, %s243
      %p245 = scmp.eq.s32.totalorder %s27, 0
      %p246 = por %p244, %p245
      %s248 = sadd.s32 %s247, 1
      %p251 = scmp.eq.s32.totalorder %s21, 1
      %p252 = scmp.ne.s32.totalorder %s247, %s249
      %p253 = scmp.eq.s32.totalorder %s21, 0
      %p254 = por %p252, %p253
      %p255 = scmp.ne.s32.totalorder %s247, %s249
      %p256 = scmp.eq.s32.totalorder %s26, 1
      %p257 = por %p255, %p256
      %p258 = scmp.ne.s32.totalorder %s249, %s250
      %p259 = scmp.eq.s32.totalorder %s26, 0
      %p260 = por %p258, %p259
      %p261 = scmp.ne.s32.totalorder %s249, %s250
      %p262 = scmp.eq.s32.totalorder %s27, 1
      %p263 = por %p261, %p262
      %p265 = scmp.ne.s32.totalorder %s250, %s264
      %p266 = scmp.eq.s32.totalorder %s27, 0
      %p267 = por %p265, %p266
      %s269 = sadd.s32 %s268, 1
      %p272 = scmp.eq.s32.totalorder %s21, 1
      %p273 = scmp.ne.s32.totalorder %s268, %s270
      %p274 = scmp.eq.s32.totalorder %s21, 0
      %p275 = por %p273, %p274
      %p276 = scmp.ne.s32.totalorder %s268, %s270
      %p277 = scmp.eq.s32.totalorder %s26, 1
      %p278 = por %p276, %p277
      %p279 = scmp.ne.s32.totalorder %s270, %s271
      %p280 = scmp.eq.s32.totalorder %s26, 0
      %p281 = por %p279, %p280
      %p282 = scmp.ne.s32.totalorder %s270, %s271
      %p283 = scmp.eq.s32.totalorder %s27, 1
      %p284 = por %p282, %p283
      %p286 = scmp.ne.s32.totalorder %s271, %s285
      %p287 = scmp.eq.s32.totalorder %s27, 0
      %p288 = por %p286, %p287
      %s290 = sadd.s32 %s289, 1
      %p293 = scmp.eq.s32.totalorder %s21, 1
      %p294 = scmp.ne.s32.totalorder %s289, %s291
      %p295 = scmp.eq.s32.totalorder %s21, 0
      %p296 = por %p294, %p295
      %p297 = scmp.ne.s32.totalorder %s289, %s291
      %p298 = scmp.eq.s32.totalorder %s26, 1
      %p299 = por %p297, %p298
      %p300 = scmp.ne.s32.totalorder %s291, %s292
      %p301 = scmp.eq.s32.totalorder %s26, 0
      %p302 = por %p300, %p301
      %p303 = scmp.ne.s32.totalorder %s291, %s292
      %p304 = scmp.eq.s32.totalorder %s27, 1
      %p305 = por %p303, %p304
      %p307 = scmp.ne.s32.totalorder %s292, %s306
      %p308 = scmp.eq.s32.totalorder %s27, 0
      %p309 = por %p307, %p308
      %s310 = ssub.s32 %s28, %s40
      %s311 = ssub.s32 %s29, %s36
      %s312 = sor.u32 %s310, %s311
      %p313 = scmp.eq.s32.totalorder %s312, 0
      %s315 = sadd.s32 %s314, 1
      %s316 = scalar_select %p313, %s314, %s315
      %p319 = pneg %p313
      %p320 = scmp.eq.s32.totalorder %s21, 1
      %p321 = por %p319, %p320
      %p322 = scmp.ne.s32.totalorder %s314, %s317
      %p323 = scmp.eq.s32.totalorder %s21, 0
      %p324 = por %p322, %p323
      %p325 = scmp.ne.s32.totalorder %s314, %s317
      %p326 = scmp.eq.s32.totalorder %s26, 1
      %p327 = por %p325, %p326
      %p328 = scmp.ne.s32.totalorder %s317, %s318
      %p329 = scmp.eq.s32.totalorder %s26, 0
      %p330 = por %p328, %p329
      %p331 = scmp.ne.s32.totalorder %s317, %s318
      %p332 = scmp.eq.s32.totalorder %s27, 1
      %p333 = por %p331, %p332
      %p335 = scmp.ne.s32.totalorder %s318, %s334
      %p336 = scmp.eq.s32.totalorder %s27, 0
      %p337 = por %p335, %p336
      %p338 = scmp.le.s32.totalorder 1, %s21
      %p339 = scmp.lt.s32.totalorder %s21, 3
      %p340 = pnand %p338, %p339
      %p341 = pneg %p340
      // Predicated region
      $region9: #{tpu_custom_call.1} parent=5 // pred_check
        _
      $region10: #{tpu_custom_call.1} parent=5 // pred_check_branch
        %343 = sbr.rel (%p340) target = $region12
      $region11: #{tpu_custom_call.1} parent=5 // pred_region
        %s344 = ssub.s32 %s21, 1
        // Predicated region
        $region13: #{tpu_custom_call.1} parent=11 // pred_check
          %p345 = pneg %p134
        $region14: #{tpu_custom_call.1} parent=11 // pred_check_branch
          %347 = sbr.rel (%p345) target = $region16
        $region15: #{tpu_custom_call.1} parent=11 // pred_region
          _
        $region16: #{tpu_custom_call.1} parent=11 // pred_fallthru
          _
        // Predicated region
        $region17: #{tpu_custom_call.1} parent=11 // pred_check
          %p348 = pneg %p155
        $region18: #{tpu_custom_call.1} parent=11 // pred_check_branch
          %350 = sbr.rel (%p348) target = $region20
        $region19: #{tpu_custom_call.1} parent=11 // pred_region
          _
        $region20: #{tpu_custom_call.1} parent=11 // pred_fallthru
          _
        // Predicated region
        $region21: #{tpu_custom_call.1} parent=11 // pred_check
          %p351 = pneg %p176
        $region22: #{tpu_custom_call.1} parent=11 // pred_check_branch
          %353 = sbr.rel (%p351) target = $region24
        $region23: #{tpu_custom_call.1} parent=11 // pred_region
          _
        $region24: #{tpu_custom_call.1} parent=11 // pred_fallthru
          _
        // Predicated region
        $region25: #{tpu_custom_call.1} parent=11 // pred_check
          %p354 = pneg %p197
        $region26: #{tpu_custom_call.1} parent=11 // pred_check_branch
          %356 = sbr.rel (%p354) target = $region28
        $region27: #{tpu_custom_call.1} parent=11 // pred_region
          _
        $region28: #{tpu_custom_call.1} parent=11 // pred_fallthru
          _
        // Predicated region
        $region29: #{tpu_custom_call.1} parent=11 // pred_check
          %p357 = pneg %p218
        $region30: #{tpu_custom_call.1} parent=11 // pred_check_branch
          %359 = sbr.rel (%p357) target = $region32
        $region31: #{tpu_custom_call.1} parent=11 // pred_region
          _
        $region32: #{tpu_custom_call.1} parent=11 // pred_fallthru
          _
        // Predicated region
        $region33: #{tpu_custom_call.1} parent=11 // pred_check
          %p360 = pneg %p239
        $region34: #{tpu_custom_call.1} parent=11 // pred_check_branch
          %362 = sbr.rel (%p360) target = $region36
        $region35: #{tpu_custom_call.1} parent=11 // pred_region
          _
        $region36: #{tpu_custom_call.1} parent=11 // pred_fallthru
          _
        // Predicated region
        $region37: #{tpu_custom_call.1} parent=11 // pred_check
          %p363 = pneg %p260
        $region38: #{tpu_custom_call.1} parent=11 // pred_check_branch
          %365 = sbr.rel (%p363) target = $region40
        $region39: #{tpu_custom_call.1} parent=11 // pred_region
          _
        $region40: #{tpu_custom_call.1} parent=11 // pred_fallthru
          _
        // Predicated region
        $region41: #{tpu_custom_call.1} parent=11 // pred_check
          %p366 = pneg %p281
        $region42: #{tpu_custom_call.1} parent=11 // pred_check_branch
          %368 = sbr.rel (%p366) target = $region44
        $region43: #{tpu_custom_call.1} parent=11 // pred_region
          _
        $region44: #{tpu_custom_call.1} parent=11 // pred_fallthru
          _
        // Predicated region
        $region45: #{tpu_custom_call.1} parent=11 // pred_check
          %p369 = pneg %p302
        $region46: #{tpu_custom_call.1} parent=11 // pred_check_branch
          %371 = sbr.rel (%p369) target = $region48
        $region47: #{tpu_custom_call.1} parent=11 // pred_region
          _
        $region48: #{tpu_custom_call.1} parent=11 // pred_fallthru
          _
      $region12: #{tpu_custom_call.1} parent=5 // pred_fallthru
        _
      %p372 = scmp.lt.s32.totalorder %s21, 2
      // Predicated region
      $region49: #{tpu_custom_call.1} parent=5 // pred_check
        %p373 = pneg %p372
      $region50: #{tpu_custom_call.1} parent=5 // pred_check_branch
        %375 = sbr.rel (%p373) target = $region52
      $region51: #{tpu_custom_call.1} parent=5 // pred_region
        // Predicated region
        $region53: #{tpu_custom_call.1} parent=51 // pred_check
          %p376 = pneg %p55
        $region54: #{tpu_custom_call.1} parent=51 // pred_check_branch
          %378 = sbr.rel (%p376) target = $region56
        $region55: #{tpu_custom_call.1} parent=51 // pred_region
          %s379 = smul.u32 2, %s29
          %p380 = scmp.lt.s32.totalorder %s28, 1
          %s381 = scalar_select %p380, %s28, 1
          %p382 = scmp.lt.s32.totalorder %s379, 1
          %s383 = scalar_select %p382, %s379, 1
          %s384 = smul.addr %s381, 4
          %s385 = sadd.s32 %s383, %s384
          %s386 = smul.addr %s385, 4
          %s387 = scalar_lea.vmem %s0, %s386
          %s388 = smul.u32 2, %s29
        $region56: #{tpu_custom_call.1} parent=51 // pred_fallthru
          _
        // Predicated region
        $region57: #{tpu_custom_call.1} parent=51 // pred_check
          %p389 = pneg %p81
        $region58: #{tpu_custom_call.1} parent=51 // pred_check_branch
          %391 = sbr.rel (%p389) target = $region60
        $region59: #{tpu_custom_call.1} parent=51 // pred_region
          %p392 = scmp.lt.s32.totalorder %s28, 1
          %s393 = scalar_select %p392, %s28, 1
          %s394 = smul.addr %s393, 4
          %s395 = scalar_lea.vmem %s1, %s394
        $region60: #{tpu_custom_call.1} parent=51 // pred_fallthru
          _
        // Predicated region
        $region61: #{tpu_custom_call.1} parent=51 // pred_check
          %p396 = pneg %p107
        $region62: #{tpu_custom_call.1} parent=51 // pred_check_branch
          %398 = sbr.rel (%p396) target = $region64
        $region63: #{tpu_custom_call.1} parent=51 // pred_region
          %p399 = scmp.lt.s32.totalorder %s28, 1
          %s400 = scalar_select %p399, %s28, 1
          %s401 = smul.addr %s400, 4
          %s402 = scalar_lea.vmem %s2, %s401
        $region64: #{tpu_custom_call.1} parent=51 // pred_fallthru
          _
      $region52: #{tpu_custom_call.1} parent=5 // pred_fallthru
        _
      %p403 = scmp.le.s32.totalorder 1, %s21
      %p404 = scmp.lt.s32.totalorder %s21, 3
      %p405 = pnand %p403, %p404
      %p406 = pneg %p405
      // Predicated region
      $region65: #{tpu_custom_call.1} parent=5 // pred_check
        _
      $region66: #{tpu_custom_call.1} parent=5 // pred_check_branch
        %408 = sbr.rel (%p405) target = $region68
      $region67: #{tpu_custom_call.1} parent=5 // pred_region
        %s409 = ssub.s32 %s21, 1
        %s410 = smul.u32 2, %s31
        %p411 = scmp.lt.s32.totalorder %s30, 1
        %s412 = scalar_select %p411, %s30, 1
        %p413 = scmp.lt.s32.totalorder %s410, 1
        %s414 = scalar_select %p413, %s410, 1
        %s415 = smul.addr %s412, 4
        %s416 = sadd.s32 %s414, %s415
        %s417 = smul.addr %s416, 4
        %s418 = scalar_lea.vmem %s0, %s417
        %p419 = pneg %p61
        %p420 = pneg %p58
        %p421 = scmp.lt.s32.totalorder %s30, 1
        %s422 = scalar_select %p421, %s30, 1
        %s423 = smul.addr %s422, 4
        %s424 = scalar_lea.vmem %s1, %s423
        %p425 = pneg %p87
        %p426 = pneg %p84
        %p427 = scmp.lt.s32.totalorder %s30, 1
        %s428 = scalar_select %p427, %s30, 1
        %s429 = smul.addr %s428, 4
        %s430 = scalar_lea.vmem %s2, %s429
        %p431 = pneg %p113
        %p432 = pneg %p110
        %p433 = pneg %p134
        %p434 = pneg %p131
        %p435 = pneg %p155
        %p436 = pneg %p152
        %p437 = pneg %p176
        %p438 = pneg %p173
        %p439 = pneg %p197
        %p440 = pneg %p194
        %p441 = pneg %p218
        %p442 = pneg %p215
        %p443 = pneg %p239
        %p444 = pneg %p236
        %p445 = pneg %p260
        %p446 = pneg %p257
        %p447 = pneg %p281
        %p448 = pneg %p278
        %p449 = pneg %p302
        %p450 = pneg %p299
        %p451 = pneg %p330
        %p452 = pneg %p327
        %s453 = sand.u32 %s317, 1
        %s454 = scalar_lea.sflag [#allocation3], %s453
        %s455 = sand.u32 %s317, 1
        %s456 = smul.addr %s455, 16
        %s457 = scalar_lea.vmem [#allocation2], %s456
        %s458 = smul.u32 2, %s31
        %p459 = scmp.lt.s32.totalorder %s30, 1
        %s460 = scalar_select %p459, %s30, 1
        %p461 = scmp.lt.s32.totalorder %s458, 1
        %s462 = scalar_select %p461, %s458, 1
        %s463 = smul.addr %s460, 4
        %s464 = sadd.s32 %s462, %s463
        %s465 = smul.addr %s464, 4
        %s466 = scalar_lea.vmem %s0, %s465
        %s467 = smul.u32 2, %s31
        %p468 = scmp.lt.s32.totalorder %s30, 1
        %s469 = scalar_select %p468, %s30, 1
        %s470 = smul.addr %s469, 4
        %s471 = scalar_lea.vmem %s1, %s470
        %p472 = scmp.lt.s32.totalorder %s30, 1
        %s473 = scalar_select %p472, %s30, 1
        %s474 = smul.addr %s473, 4
        %s475 = scalar_lea.vmem %s2, %s474
        %s476 = smul.u32 2, %s31
        %v478 = vld [vmem:[%s466] sm:$0xff]
        %v479 = vld [vmem:[%s466 + $0x8] sm:$0xff]
        %v480 = vld [vmem:[%s471] sm:$0xf]
        %v481 = vld [vmem:[%s475] sm:$0xf]
        %v482 = vld [vmem:[%s3] sm:$0xf]
        %v483 = vld [vmem:[%s4] sm:$0xff]
        %485 = vset.pattern.permute.xlu0 0
        %486 = vperm.xlu0 %485, %v483
        %v487 = vpop.permute.xlu0 %486
        %v491 = vunpack.c.l.b16 %v478
        %v492 = vunpack.c.h.b16 %v478
        %v493 = vunpack.c.l.b16 %v479
        %v494 = vunpack.c.h.b16 %v479
        %v495 = vpack.c.b16 %v493, %v491
        %v496 = vpack.c.b16 %v494, %v492
        %vm499 = vcmask 130048
        %v501 = vsel %vm499, %v482, 0
        %503 = vmatprep.subr.bf16.mxu0 %v496
        %504 = vmatpush1.bf16.msra.mxu0 %v495
        %505 = vmatprep.subr.bf16.mxu0 0
        %506 = vmatpush1.bf16.msra.mxu0 0
        %507 = vmatprep.subr.bf16.mxu0 0
        %508 = vmatpush1.bf16.msra.mxu0 0
        %509 = vmatprep.subr.bf16.mxu0 0
        %510 = vmatpush1.bf16.msra.mxu0 0
        %511 = vmatprep.subr.bf16.mxu0 0
        %512 = vmatpush1.bf16.msra.mxu0 0
        %513 = vmatprep.subr.bf16.mxu0 0
        %514 = vmatpush1.bf16.msra.mxu0 0
        %515 = vmatprep.subr.bf16.mxu0 0
        %516 = vmatpush1.bf16.msra.mxu0 0
        %517 = vmatprep.subr.bf16.mxu0 0
        %518 = vmatpush1.bf16.msra.mxu0 0
        %519 = vmatprep.subr.bf16.mxu0 0
        %520 = vmatpush1.bf16.msra.mxu0 0
        %521 = vmatprep.subr.bf16.mxu0 0
        %522 = vmatpush1.bf16.msra.mxu0 0
        %523 = vmatprep.subr.bf16.mxu0 0
        %524 = vmatpush1.bf16.msra.mxu0 0
        %525 = vmatprep.subr.bf16.mxu0 0
        %526 = vmatpush1.bf16.msra.mxu0 0
        %527 = vmatprep.subr.bf16.mxu0 0
        %528 = vmatpush1.bf16.msra.mxu0 0
        %529 = vmatprep.subr.bf16.mxu0 0
        %530 = vmatpush1.bf16.msra.mxu0 0
        %531 = vmatprep.subr.bf16.mxu0 0
        %532 = vmatpush1.bf16.msra.mxu0 0
        %533 = vmatprep.subr.bf16.mxu0 0
        %534 = vmatpush1.bf16.msra.mxu0 0
        %535 = vmatprep.mubr.bf16.mxu0 0
        %536 = vmatmul.mubr.bf16.gmra.mrb[0].mxu0 %v501
        %v537 = vpop.f32.mrb[0].mxu0
        %v538 = vadd.f32 %v487, %v537
        %v539 = vpop.f32.mrb[0].mxu0
        %v540 = vadd.f32 %v487, %v539
        %v541 = vpop.f32.mrb[0].mxu0
        %v542 = vpop.f32.mrb[0].mxu0
        %543 = vdwg.mxu0
        %v544 = vmax.f32 %v538, 0.0
        %v545 = vmax.f32 %v540, 0.0
        %v546 = vld [vmem:[%s5] sm:$0xf]
        %v547 = vpack.c.bf16 %v544, %v544
        %v548 = vpack.c.bf16 %v545, %v545
        %v549 = vld [vmem:[%s6] sm:$0xff]
        %551 = vset.pattern.permute.xlu0 0
        %552 = vperm.xlu0 %551, %v549
        %v553 = vpop.permute.xlu0 %552
        %vm555 = vcmask 64512
        %v557 = vsel %vm555, %v546, 0
        %vm559 = vcmask 1043456
        %v561 = vsel %vm559, %v547, 0
        %v564 = vsel %vm559, %v548, 0
        %566 = vmatprep.subr.bf16.mxu0 %v564
        %567 = vmatpush1.bf16.msra.mxu0 %v561
        %568 = vmatprep.subr.bf16.mxu0 0
        %569 = vmatpush1.bf16.msra.mxu0 0
        %570 = vmatprep.subr.bf16.mxu0 0
        %571 = vmatpush1.bf16.msra.mxu0 0
        %572 = vmatprep.subr.bf16.mxu0 0
        %573 = vmatpush1.bf16.msra.mxu0 0
        %574 = vmatprep.subr.bf16.mxu0 0
        %575 = vmatpush1.bf16.msra.mxu0 0
        %576 = vmatprep.subr.bf16.mxu0 0
        %577 = vmatpush1.bf16.msra.mxu0 0
        %578 = vmatprep.subr.bf16.mxu0 0
        %579 = vmatpush1.bf16.msra.mxu0 0
        %580 = vmatprep.subr.bf16.mxu0 0
        %581 = vmatpush1.bf16.msra.mxu0 0
        %582 = vmatprep.subr.bf16.mxu0 0
        %583 = vmatpush1.bf16.msra.mxu0 0
        %584 = vmatprep.subr.bf16.mxu0 0
        %585 = vmatpush1.bf16.msra.mxu0 0
        %586 = vmatprep.subr.bf16.mxu0 0
        %587 = vmatpush1.bf16.msra.mxu0 0
        %588 = vmatprep.subr.bf16.mxu0 0
        %589 = vmatpush1.bf16.msra.mxu0 0
        %590 = vmatprep.subr.bf16.mxu0 0
        %591 = vmatpush1.bf16.msra.mxu0 0
        %592 = vmatprep.subr.bf16.mxu0 0
        %593 = vmatpush1.bf16.msra.mxu0 0
        %594 = vmatprep.subr.bf16.mxu0 0
        %595 = vmatpush1.bf16.msra.mxu0 0
        %596 = vmatprep.subr.bf16.mxu0 0
        %597 = vmatpush1.bf16.msra.mxu0 0
        %598 = vmatprep.mubr.bf16.mxu0 0
        %599 = vmatmul.mubr.bf16.gmra.mrb[0].mxu0 %v557
        %v600 = vpop.f32.mrb[0].mxu0
        %v601 = vadd.f32 %v553, %v600
        %v602 = vpop.f32.mrb[0].mxu0
        %v603 = vadd.f32 %v553, %v602
        %v604 = vpop.f32.mrb[0].mxu0
        %v605 = vpop.f32.mrb[0].mxu0
        %606 = vdwg.mxu0
        %v607 = vmax.f32 %v601, 0.0
        %v608 = vmax.f32 %v603, 0.0
        %v609 = vpack.c.bf16 %v607, %v607
        %v610 = vpack.c.bf16 %v608, %v608
        %v612 = vsel %vm555, %v480, 0
        %v615 = vsel %vm559, %v609, 0
        %v618 = vsel %vm559, %v610, 0
        %620 = vmatprep.subr.bf16.mxu0 %v618
        %621 = vmatpush1.bf16.msra.mxu0 %v615
        %622 = vmatprep.subr.bf16.mxu0 0
        %623 = vmatpush1.bf16.msra.mxu0 0
        %624 = vmatprep.subr.bf16.mxu0 0
        %625 = vmatpush1.bf16.msra.mxu0 0
        %626 = vmatprep.subr.bf16.mxu0 0
        %627 = vmatpush1.bf16.msra.mxu0 0
        %628 = vmatprep.subr.bf16.mxu0 0
        %629 = vmatpush1.bf16.msra.mxu0 0
        %630 = vmatprep.subr.bf16.mxu0 0
        %631 = vmatpush1.bf16.msra.mxu0 0
        %632 = vmatprep.subr.bf16.mxu0 0
        %633 = vmatpush1.bf16.msra.mxu0 0
        %634 = vmatprep.subr.bf16.mxu0 0
        %635 = vmatpush1.bf16.msra.mxu0 0
        %636 = vmatprep.subr.bf16.mxu0 0
        %637 = vmatpush1.bf16.msra.mxu0 0
        %638 = vmatprep.subr.bf16.mxu0 0
        %639 = vmatpush1.bf16.msra.mxu0 0
        %640 = vmatprep.subr.bf16.mxu0 0
        %641 = vmatpush1.bf16.msra.mxu0 0
        %642 = vmatprep.subr.bf16.mxu0 0
        %643 = vmatpush1.bf16.msra.mxu0 0
        %644 = vmatprep.subr.bf16.mxu0 0
        %645 = vmatpush1.bf16.msra.mxu0 0
        %646 = vmatprep.subr.bf16.mxu0 0
        %647 = vmatpush1.bf16.msra.mxu0 0
        %648 = vmatprep.subr.bf16.mxu0 0
        %649 = vmatpush1.bf16.msra.mxu0 0
        %650 = vmatprep.subr.bf16.mxu0 0
        %651 = vmatpush1.bf16.msra.mxu0 0
        %652 = vmatprep.mubr.bf16.mxu0 0
        %653 = vmatmul.mubr.bf16.gmra.mrb[0].mxu0 %v612
        %v654 = vpop.f32.mrb[0].mxu0
        %v655 = vadd.f32 0.0, %v654
        %v656 = vpop.f32.mrb[0].mxu0
        %v657 = vadd.f32 0.0, %v656
        %v658 = vpop.f32.mrb[0].mxu0
        %v659 = vpop.f32.mrb[0].mxu0
        %660 = vdwg.mxu0
        %v661 = vrot.slane %v655, 4
        %v662 = vmax.f32 %v655, %v661
        %v663 = vrot.slane %v662, 2
        %v664 = vmax.f32 %v662, %v663
        %v665 = vrot.slane %v664, 1
        %v666 = vmax.f32 %v664, %v665
        %v667 = vrot.slane %v657, 4
        %v668 = vmax.f32 %v657, %v667
        %v669 = vrot.slane %v668, 2
        %v670 = vmax.f32 %v668, %v669
        %v671 = vrot.slane %v670, 1
        %v672 = vmax.f32 %v670, %v671
        %v673 = vsub.f32 %v655, %v666
        %v674 = vsub.f32 %v657, %v672
        %v675 = vmul.f32 %v673, 1.442695
        %v676 = vpow.pop %v675
        %v677 = vmul.f32 %v674, 1.442695
        %v678 = vpow.pop %v677
        %v679 = vrot.slane %v676, 4
        %v680 = vadd.f32 %v676, %v679
        %v681 = vrot.slane %v680, 2
        %v682 = vadd.f32 %v680, %v681
        %v683 = vrot.slane %v682, 1
        %v684 = vadd.f32 %v682, %v683
        %v685 = vrot.slane %v678, 4
        %v686 = vadd.f32 %v678, %v685
        %v687 = vrot.slane %v686, 2
        %v688 = vadd.f32 %v686, %v687
        %v689 = vrot.slane %v688, 1
        %v690 = vadd.f32 %v688, %v689
        %v691 = vrcp.pop %v684
        %v692 = vrcp.pop %v690
        %v693 = vmul.f32 %v676, %v691
        %v694 = vmul.f32 %v678, %v692
        %v695 = vpack.c.bf16 %v693, %v693
        %v696 = vpack.c.bf16 %v694, %v694
        %v698 = vsel %vm555, %v481, 0
        %v701 = vsel %vm559, %v695, 0
        %v704 = vsel %vm559, %v696, 0
        %706 = vmatprep.subr.bf16.mxu0 %v704
        %707 = vmatpush1.bf16.msra.mxu0 %v701
        %708 = vmatprep.subr.bf16.mxu0 0
        %709 = vmatpush1.bf16.msra.mxu0 0
        %710 = vmatprep.subr.bf16.mxu0 0
        %711 = vmatpush1.bf16.msra.mxu0 0
        %712 = vmatprep.subr.bf16.mxu0 0
        %713 = vmatpush1.bf16.msra.mxu0 0
        %714 = vmatprep.subr.bf16.mxu0 0
        %715 = vmatpush1.bf16.msra.mxu0 0
        %716 = vmatprep.subr.bf16.mxu0 0
        %717 = vmatpush1.bf16.msra.mxu0 0
        %718 = vmatprep.subr.bf16.mxu0 0
        %719 = vmatpush1.bf16.msra.mxu0 0
        %720 = vmatprep.subr.bf16.mxu0 0
        %721 = vmatpush1.bf16.msra.mxu0 0
        %722 = vmatprep.subr.bf16.mxu0 0
        %723 = vmatpush1.bf16.msra.mxu0 0
        %724 = vmatprep.subr.bf16.mxu0 0
        %725 = vmatpush1.bf16.msra.mxu0 0
        %726 = vmatprep.subr.bf16.mxu0 0
        %727 = vmatpush1.bf16.msra.mxu0 0
        %728 = vmatprep.subr.bf16.mxu0 0
        %729 = vmatpush1.bf16.msra.mxu0 0
        %730 = vmatprep.subr.bf16.mxu0 0
        %731 = vmatpush1.bf16.msra.mxu0 0
        %732 = vmatprep.subr.bf16.mxu0 0
        %733 = vmatpush1.bf16.msra.mxu0 0
        %734 = vmatprep.subr.bf16.mxu0 0
        %735 = vmatpush1.bf16.msra.mxu0 0
        %736 = vmatprep.subr.bf16.mxu0 0
        %737 = vmatpush1.bf16.msra.mxu0 0
        %738 = vmatprep.mubr.bf16.mxu0 0
        %739 = vmatmul.mubr.bf16.gmra.mrb[0].mxu0 %v698
        %v740 = vpop.f32.mrb[0].mxu0
        %v741 = vadd.f32 0.0, %v740
        %v742 = vpop.f32.mrb[0].mxu0
        %v743 = vadd.f32 0.0, %v742
        %v744 = vpop.f32.mrb[0].mxu0
        %v745 = vpop.f32.mrb[0].mxu0
        %746 = vdwg.mxu0
        %v747 = vld [vmem:[%s7] sm:$0xf]
        %v748 = vld [vmem:[%s7 + $0x4] sm:$0xf]
        %v749 = vpack.c.bf16 %v741, %v741
        %v750 = vpack.c.bf16 %v743, %v743
        %v751 = vld [vmem:[%s8] sm:$0xff]
        %v752 = vld [vmem:[%s8 + $0x8] sm:$0xff]
        %754 = vset.pattern.permute.xlu0 0
        %755 = vperm.xlu0 %754, %v751
        %v756 = vpop.permute.xlu0 %755
        %759 = vset.pattern.permute.xlu0 0
        %760 = vperm.xlu0 %759, %v752
        %v761 = vpop.permute.xlu0 %760
        %v765 = vunpack.c.l.b16 %v747
        %v766 = vunpack.c.l.b16 %v748
        %v767 = vpack.c.b16 %v766, %v765
        %v769 = vsel %vm555, %v767, 0
        %v772 = vsel %vm559, %v749, 0
        %v775 = vsel %vm559, %v750, 0
        %777 = vmatprep.subr.bf16.mxu0 %v775
        %778 = vmatpush1.bf16.msra.mxu0 %v772
        %779 = vmatprep.subr.bf16.mxu0 0
        %780 = vmatpush1.bf16.msra.mxu0 0
        %781 = vmatprep.subr.bf16.mxu0 0
        %782 = vmatpush1.bf16.msra.mxu0 0
        %783 = vmatprep.subr.bf16.mxu0 0
        %784 = vmatpush1.bf16.msra.mxu0 0
        %785 = vmatprep.subr.bf16.mxu0 0
        %786 = vmatpush1.bf16.msra.mxu0 0
        %787 = vmatprep.subr.bf16.mxu0 0
        %788 = vmatpush1.bf16.msra.mxu0 0
        %789 = vmatprep.subr.bf16.mxu0 0
        %790 = vmatpush1.bf16.msra.mxu0 0
        %791 = vmatprep.subr.bf16.mxu0 0
        %792 = vmatpush1.bf16.msra.mxu0 0
        %793 = vmatprep.subr.bf16.mxu0 0
        %794 = vmatpush1.bf16.msra.mxu0 0
        %795 = vmatprep.subr.bf16.mxu0 0
        %796 = vmatpush1.bf16.msra.mxu0 0
        %797 = vmatprep.subr.bf16.mxu0 0
        %798 = vmatpush1.bf16.msra.mxu0 0
        %799 = vmatprep.subr.bf16.mxu0 0
        %800 = vmatpush1.bf16.msra.mxu0 0
        %801 = vmatprep.subr.bf16.mxu0 0
        %802 = vmatpush1.bf16.msra.mxu0 0
        %803 = vmatprep.subr.bf16.mxu0 0
        %804 = vmatpush1.bf16.msra.mxu0 0
        %805 = vmatprep.subr.bf16.mxu0 0
        %806 = vmatpush1.bf16.msra.mxu0 0
        %807 = vmatprep.subr.bf16.mxu0 0
        %808 = vmatpush1.bf16.msra.mxu0 0
        %809 = vmatprep.mubr.bf16.mxu0 0
        %810 = vmatmul.mubr.bf16.gmra.mrb[0].mxu0 %v769
        %v811 = vpop.f32.mrb[0].mxu0
        %v812 = vadd.f32 %v756, %v811
        %v813 = vpop.f32.mrb[0].mxu0
        %v814 = vadd.f32 %v756, %v813
        %v815 = vpop.f32.mrb[0].mxu0
        %v816 = vadd.f32 %v761, %v815
        %v817 = vpop.f32.mrb[0].mxu0
        %v818 = vadd.f32 %v761, %v817
        %819 = vdwg.mxu0
        %v820 = vmax.f32 %v812, 0.0
        %v821 = vmax.f32 %v814, 0.0
        %v822 = vmax.f32 %v816, 0.0
        %v823 = vmax.f32 %v818, 0.0
        %v824 = vld [vmem:[%s9] sm:$0xf]
        %v825 = vld [vmem:[%s9 + $0x4] sm:$0xf]
        %v826 = vpack.c.bf16 %v822, %v820
        %v827 = vpack.c.bf16 %v823, %v821
        %v828 = vld [vmem:[%s10] sm:$0xf]
        %v829 = vld [vmem:[%s10 + $0x4] sm:$0xf]
        %v832 = vunpack.c.l.b16 %v828
        %v833 = vunpack.c.l.b16 %v829
        %v834 = vpack.c.b16 %v833, %v832
        %v836 = vsel %vm499, %v834, 0
        %838 = vmatprep.subr.bf16.mxu0 %v496
        %839 = vmatpush1.bf16.msra.mxu0 %v495
        %840 = vmatprep.subr.bf16.mxu0 0
        %841 = vmatpush1.bf16.msra.mxu0 0
        %842 = vmatprep.subr.bf16.mxu0 0
        %843 = vmatpush1.bf16.msra.mxu0 0
        %844 = vmatprep.subr.bf16.mxu0 0
        %845 = vmatpush1.bf16.msra.mxu0 0
        %846 = vmatprep.subr.bf16.mxu0 0
        %847 = vmatpush1.bf16.msra.mxu0 0
        %848 = vmatprep.subr.bf16.mxu0 0
        %849 = vmatpush1.bf16.msra.mxu0 0
        %850 = vmatprep.subr.bf16.mxu0 0
        %851 = vmatpush1.bf16.msra.mxu0 0
        %852 = vmatprep.subr.bf16.mxu0 0
        %853 = vmatpush1.bf16.msra.mxu0 0
        %854 = vmatprep.subr.bf16.mxu0 0
        %855 = vmatpush1.bf16.msra.mxu0 0
        %856 = vmatprep.subr.bf16.mxu0 0
        %857 = vmatpush1.bf16.msra.mxu0 0
        %858 = vmatprep.subr.bf16.mxu0 0
        %859 = vmatpush1.bf16.msra.mxu0 0
        %860 = vmatprep.subr.bf16.mxu0 0
        %861 = vmatpush1.bf16.msra.mxu0 0
        %862 = vmatprep.subr.bf16.mxu0 0
        %863 = vmatpush1.bf16.msra.mxu0 0
        %864 = vmatprep.subr.bf16.mxu0 0
        %865 = vmatpush1.bf16.msra.mxu0 0
        %866 = vmatprep.subr.bf16.mxu0 0
        %867 = vmatpush1.bf16.msra.mxu0 0
        %868 = vmatprep.subr.bf16.mxu0 0
        %869 = vmatpush1.bf16.msra.mxu0 0
        %870 = vmatprep.mubr.bf16.mxu0 0
        %871 = vmatmul.mubr.bf16.gmra.mrb[0].mxu0 %v836
        %v872 = vpop.f32.mrb[0].mxu0
        %v873 = vadd.f32 0.0, %v872
        %v874 = vpop.f32.mrb[0].mxu0
        %v875 = vadd.f32 0.0, %v874
        %v876 = vpop.f32.mrb[0].mxu0
        %v877 = vadd.f32 0.0, %v876
        %v878 = vpop.f32.mrb[0].mxu0
        %v879 = vadd.f32 0.0, %v878
        %880 = vdwg.mxu0
        %v883 = vunpack.c.l.b16 %v824
        %v884 = vunpack.c.l.b16 %v825
        %v885 = vpack.c.b16 %v884, %v883
        %v887 = vsel %vm499, %v885, 0
        %889 = vmatprep.subr.bf16.mxu0 %v827
        %890 = vmatpush1.bf16.msra.mxu0 %v826
        %891 = vmatprep.subr.bf16.mxu0 0
        %892 = vmatpush1.bf16.msra.mxu0 0
        %893 = vmatprep.subr.bf16.mxu0 0
        %894 = vmatpush1.bf16.msra.mxu0 0
        %895 = vmatprep.subr.bf16.mxu0 0
        %896 = vmatpush1.bf16.msra.mxu0 0
        %897 = vmatprep.subr.bf16.mxu0 0
        %898 = vmatpush1.bf16.msra.mxu0 0
        %899 = vmatprep.subr.bf16.mxu0 0
        %900 = vmatpush1.bf16.msra.mxu0 0
        %901 = vmatprep.subr.bf16.mxu0 0
        %902 = vmatpush1.bf16.msra.mxu0 0
        %903 = vmatprep.subr.bf16.mxu0 0
        %904 = vmatpush1.bf16.msra.mxu0 0
        %905 = vmatprep.subr.bf16.mxu0 0
        %906 = vmatpush1.bf16.msra.mxu0 0
        %907 = vmatprep.subr.bf16.mxu0 0
        %908 = vmatpush1.bf16.msra.mxu0 0
        %909 = vmatprep.subr.bf16.mxu0 0
        %910 = vmatpush1.bf16.msra.mxu0 0
        %911 = vmatprep.subr.bf16.mxu0 0
        %912 = vmatpush1.bf16.msra.mxu0 0
        %913 = vmatprep.subr.bf16.mxu0 0
        %914 = vmatpush1.bf16.msra.mxu0 0
        %915 = vmatprep.subr.bf16.mxu0 0
        %916 = vmatpush1.bf16.msra.mxu0 0
        %917 = vmatprep.subr.bf16.mxu0 0
        %918 = vmatpush1.bf16.msra.mxu0 0
        %919 = vmatprep.subr.bf16.mxu0 0
        %920 = vmatpush1.bf16.msra.mxu0 0
        %921 = vmatprep.mubr.bf16.mxu0 0
        %922 = vmatmul.mubr.bf16.gmra.mrb[0].mxu0 %v887
        %v923 = vpop.f32.mrb[0].mxu0
        %v924 = vadd.f32 %v873, %v923
        %v925 = vpop.f32.mrb[0].mxu0
        %v926 = vadd.f32 %v875, %v925
        %v927 = vpop.f32.mrb[0].mxu0
        %v928 = vadd.f32 %v877, %v927
        %v929 = vpop.f32.mrb[0].mxu0
        %v930 = vadd.f32 %v879, %v929
        %931 = vdwg.mxu0
        %v932 = vld [vmem:[%s11] sm:$0xff]
        %v933 = vld [vmem:[%s11 + $0x8] sm:$0xff]
        %935 = vset.pattern.permute.xlu0 0
        %936 = vperm.xlu0 %935, %v932
        %v937 = vpop.permute.xlu0 %936
        %940 = vset.pattern.permute.xlu0 0
        %941 = vperm.xlu0 %940, %v933
        %v942 = vpop.permute.xlu0 %941
        %v944 = vadd.f32 %v924, %v937
        %v945 = vadd.f32 %v926, %v937
        %v946 = vadd.f32 %v928, %v942
        %v947 = vadd.f32 %v930, %v942
        %v948 = vmax.f32 %v944, 0.0
        %v949 = vmax.f32 %v945, 0.0
        %v950 = vmax.f32 %v946, 0.0
        %v951 = vmax.f32 %v947, 0.0
        %v952 = vpack.c.bf16 %v950, %v948
        %v953 = vpack.c.bf16 %v951, %v949
        %v956 = vunpack.c.l.b16 %v952
        %v957 = vunpack.c.l.b16 %v953
        %v958 = vunpack.c.h.b16 %v952
        %v959 = vunpack.c.h.b16 %v953
        %v960 = vpack.c.b16 %v957, %v956
        %v961 = vpack.c.b16 %v959, %v958
        %964 = vst [vmem:[%s457] sm:$0xff] %v960
        %965 = vst [vmem:[%s457 + $0x8] sm:$0xff] %v961
        %s966 = sand.u32 %s317, 1
        %s967 = scalar_lea.sflag [#allocation3], %s966
        %s968 = sand.u32 %s317, 1
        %s969 = smul.addr %s968, 16
        %s970 = scalar_lea.vmem [#allocation2], %s969
        // Predicated region
        $region69: #{tpu_custom_call.1} parent=67 // pred_check
          %p971 = pneg %p327
        $region70: #{tpu_custom_call.1} parent=67 // pred_check_branch
          %973 = sbr.rel (%p971) target = $region72
        $region71: #{tpu_custom_call.1} parent=67 // pred_region
          %s974 = smul.u32 2, %s31
          %s976 = ssub.s32 256, 256
          %977 = vsyncadd %s967, %s976
          %s978 = smul.addr %s30, 4
          %s979 = sadd.s32 %s974, %s978
          %s980 = smul.addr %s979, 64
          %s981 = scalar_lea.hbm %s12, %s980
          %s982 = sshll.u32 %s970, 4
          %s983 = int_to_ptr.vmem [resolvable:$true] %s982
          %988 = dma.vmem_to_hbm [thread:$0]  %s983, 256, %s981, %s967, 128, 128, 8
        $region72: #{tpu_custom_call.1} parent=67 // pred_fallthru
          _
      $region68: #{tpu_custom_call.1} parent=5 // pred_fallthru
        _
      %p989 = scmp.le.s32.totalorder 2, %s21
      // Predicated region
      $region73: #{tpu_custom_call.1} parent=5 // pred_check
        %p990 = pneg %p989
      $region74: #{tpu_custom_call.1} parent=5 // pred_check_branch
        %992 = sbr.rel (%p990) target = $region76
      $region75: #{tpu_custom_call.1} parent=5 // pred_region
        %s993 = ssub.s32 %s21, 2
        // Predicated region
        $region77: #{tpu_custom_call.1} parent=75 // pred_check
          %p994 = pneg %p333
        $region78: #{tpu_custom_call.1} parent=75 // pred_check_branch
          %996 = sbr.rel (%p994) target = $region80
        $region79: #{tpu_custom_call.1} parent=75 // pred_region
          %s997 = sand.u32 %s318, 1
          %s998 = scalar_lea.sflag [#allocation3], %s997
          %s999 = sand.u32 %s318, 1
          %s1000 = smul.addr %s999, 16
          %s1001 = scalar_lea.vmem [#allocation2], %s1000
          %1002 = dma.done %s998, 256
        $region80: #{tpu_custom_call.1} parent=75 // pred_fallthru
          _
      $region76: #{tpu_custom_call.1} parent=5 // pred_fallthru
        _
    $region6: #{tpu_custom_call.1} parent=1 // loop_footer
      %s25 = sadd.s32 1, %s21
    $region7: #{tpu_custom_call.1} parent=1 // loop_footer_branch
      %20 = sbr.rel target = $region3
    $region8: #{tpu_custom_call.1} parent=1 // loop_exit
      _
    %1003 = vsyncpa [#allocation3], 1
    %s1004 = scalar_lea.sflag [#allocation3], 1
    %1005 = vsyncpa %s1004, 1

// kernel: tpu_custom_call.1
$region0: #{tpu_custom_call.1}
  #allocation0 [shape = 'u32[]', space=smem, size = 0x4, offset = 0x4, fixed_abs, tag = 'smem constant byte address 0x4 - core index']
  #allocation1 [shape = 'u32[144,128]{1,0:T(1,128)}', space=vmem, size = 0x12000, scoped, tag = 'internal scratch']
  %s0 = inlined_call_operand.vmem [shape: bf16[2,16,256], index: 0, kind: input, shape index: {}]
  %s1 = inlined_call_operand.vmem [shape: bf16[2,8,8], index: 1, kind: input, shape index: {}]
  %s2 = inlined_call_operand.vmem [shape: bf16[2,8,8], index: 2, kind: input, shape index: {}]
  %s3 = inlined_call_operand.vmem [shape: bf16[8,16], index: 3, kind: input, shape index: {}]
  %s4 = inlined_call_operand.vmem [shape: f32[8,1], index: 4, kind: input, shape index: {}]
  %s5 = inlined_call_operand.vmem [shape: bf16[8,8], index: 5, kind: input, shape index: {}]
  %s6 = inlined_call_operand.vmem [shape: f32[8,1], index: 6, kind: input, shape index: {}]
  %s7 = inlined_call_operand.vmem [shape: bf16[16,8], index: 7, kind: input, shape index: {}]
  %s8 = inlined_call_operand.vmem [shape: f32[16,1], index: 8, kind: input, shape index: {}]
  %s9 = inlined_call_operand.vmem [shape: bf16[16,16], index: 9, kind: input, shape index: {}]
  %s10 = inlined_call_operand.vmem [shape: bf16[16,16], index: 10, kind: input, shape index: {}]
  %s11 = inlined_call_operand.vmem [shape: f32[16,1], index: 11, kind: input, shape index: {}]
  %s12 = inlined_call_operand.hbm [shape: bf16[2,16,256], index: 12, kind: output, shape index: {}]
  %s13 = sld [smem:[#allocation0]]
  $region81: #{tpu_custom_call.1} parent=0
    _
  %s15 = ssub.s32 1, %s13
  %s16 = scalar_select 0, %s15, %s13
  $region1: #{tpu_custom_call.1} parent=0
    #allocation2 [shape = 'u8[16384]{0}', space=vmem, size = 0x4000, scoped, tag = 'output window, operand 0']
    #allocation3 [shape = 's32[2]{0}', space=sflag, size = 0x8, scoped, tag = 'scoped memory for tpu_custom_call.1']
    %17 = vsyncpa [#allocation3], 0
    %s18 = scalar_lea.sflag [#allocation3], 1
    %19 = vsyncpa %s18, 0
    loop: start=0, step=1, limit=4
    $region2: #{tpu_custom_call.1} parent=1 // loop_pre_header
      _
    $region3: #{tpu_custom_call.1} parent=1 // loop_header
      %s21 = sphi 0, %s25
      %p22 = scmp.ge.s32.totalorder %s21, 4
      %s28 = sphi 0, %s40
      %s29 = sphi 0, %s36
      %s30 = sphi 0, %s28
      %s31 = sphi 0, %s29
      %s32 = sphi 0, %s30
      %s33 = sphi 0, %s31
      %s45 = sphi 0, %s47
      %s48 = sphi 0, %s45
      %s49 = sphi 0, %s48
      %s65 = sphi 0, %s49
      %s71 = sphi 0, %s73
      %s74 = sphi 0, %s71
      %s75 = sphi 0, %s74
      %s91 = sphi 0, %s75
      %s97 = sphi 0, %s99
      %s100 = sphi 0, %s97
      %s101 = sphi 0, %s100
      %s117 = sphi 0, %s101
      %s121 = sphi 0, %s121
      %s123 = sphi 0, %s121
      %s124 = sphi 0, %s123
      %s138 = sphi 0, %s124
      %s142 = sphi 0, %s142
      %s144 = sphi 0, %s142
      %s145 = sphi 0, %s144
      %s159 = sphi 0, %s145
      %s163 = sphi 0, %s163
      %s165 = sphi 0, %s163
      %s166 = sphi 0, %s165
      %s180 = sphi 0, %s166
      %s184 = sphi 0, %s184
      %s186 = sphi 0, %s184
      %s187 = sphi 0, %s186
      %s201 = sphi 0, %s187
      %s205 = sphi 0, %s205
      %s207 = sphi 0, %s205
      %s208 = sphi 0, %s207
      %s222 = sphi 0, %s208
      %s226 = sphi 0, %s226
      %s228 = sphi 0, %s226
      %s229 = sphi 0, %s228
      %s243 = sphi 0, %s229
      %s247 = sphi 0, %s247
      %s249 = sphi 0, %s247
      %s250 = sphi 0, %s249
      %s264 = sphi 0, %s250
      %s268 = sphi 0, %s268
      %s270 = sphi 0, %s268
      %s271 = sphi 0, %s270
      %s285 = sphi 0, %s271
      %s289 = sphi 0, %s289
      %s291 = sphi 0, %s289
      %s292 = sphi 0, %s291
      %s306 = sphi 0, %s292
      %s314 = sphi 0, %s316
      %s317 = sphi 0, %s314
      %s318 = sphi 0, %s317
      %s334 = sphi 0, %s318
    $region4: #{tpu_custom_call.1} parent=1 // loop_header_branch
      %24 = sbr.rel (%p22) target = $region8
    $region5: #{tpu_custom_call.1} parent=1 // loop_body
      %s26 = ssub.s32 %s21, 1
      %s27 = ssub.s32 %s21, 2
      %s34 = sadd.s32 1, %s29
      %p35 = scmp.ge.s32.totalorder %s34, 1
      %s36 = scalar_select %p35, 0, %s34
      %s37 = sadd.s32 1, %s28
      %s38 = scalar_select %p35, %s37, %s28
      %p39 = scmp.ge.s32.totalorder %s38, 2
      %s40 = scalar_select %p39, 0, %s38
      %s41 = ssub.s32 %s28, %s40
      %s42 = ssub.s32 %s29, %s36
      %s43 = sor.u32 %s41, %s42
      %p44 = scmp.eq.s32.totalorder %s43, 0
      %s46 = sadd.s32 %s45, 1
      %s47 = scalar_select %p44, %s45, %s46
      %p50 = pneg %p44
      %p51 = scmp.eq.s32.totalorder %s21, 1
      %p52 = por %p50, %p51
      %p53 = scmp.ne.s32.totalorder %s45, %s48
      %p54 = scmp.eq.s32.totalorder %s21, 0
      %p55 = por %p53, %p54
      %p56 = scmp.ne.s32.totalorder %s45, %s48
      %p57 = scmp.eq.s32.totalorder %s26, 1
      %p58 = por %p56, %p57
      %p59 = scmp.ne.s32.totalorder %s48, %s49
      %p60 = scmp.eq.s32.totalorder %s26, 0
      %p61 = por %p59, %p60
      %p62 = scmp.ne.s32.totalorder %s48, %s49
      %p63 = scmp.eq.s32.totalorder %s27, 1
      %p64 = por %p62, %p63
      %p66 = scmp.ne.s32.totalorder %s49, %s65
      %p67 = scmp.eq.s32.totalorder %s27, 0
      %p68 = por %p66, %p67
      %s69 = ssub.s32 %s28, %s40
      %p70 = scmp.eq.s32.totalorder %s69, 0
      %s72 = sadd.s32 %s71, 1
      %s73 = scalar_select %p70, %s71, %s72
      %p76 = pneg %p70
      %p77 = scmp.eq.s32.totalorder %s21, 1
      %p78 = por %p76, %p77
      %p79 = scmp.ne.s32.totalorder %s71, %s74
      %p80 = scmp.eq.s32.totalorder %s21, 0
      %p81 = por %p79, %p80
      %p82 = scmp.ne.s32.totalorder %s71, %s74
      %p83 = scmp.eq.s32.totalorder %s26, 1
      %p84 = por %p82, %p83
      %p85 = scmp.ne.s32.totalorder %s74, %s75
      %p86 = scmp.eq.s32.totalorder %s26, 0
      %p87 = por %p85, %p86
      %p88 = scmp.ne.s32.totalorder %s74, %s75
      %p89 = scmp.eq.s32.totalorder %s27, 1
      %p90 = por %p88, %p89
      %p92 = scmp.ne.s32.totalorder %s75, %s91
      %p93 = scmp.eq.s32.totalorder %s27, 0
      %p94 = por %p92, %p93
      %s95 = ssub.s32 %s28, %s40
      %p96 = scmp.eq.s32.totalorder %s95, 0
      %s98 = sadd.s32 %s97, 1
      %s99 = scalar_select %p96, %s97, %s98
      %p102 = pneg %p96
      %p103 = scmp.eq.s32.totalorder %s21, 1
      %p104 = por %p102, %p103
      %p105 = scmp.ne.s32.totalorder %s97, %s100
      %p106 = scmp.eq.s32.totalorder %s21, 0
      %p107 = por %p105, %p106
      %p108 = scmp.ne.s32.totalorder %s97, %s100
      %p109 = scmp.eq.s32.totalorder %s26, 1
      %p110 = por %p108, %p109
      %p111 = scmp.ne.s32.totalorder %s100, %s101
      %p112 = scmp.eq.s32.totalorder %s26, 0
      %p113 = por %p111, %p112
      %p114 = scmp.ne.s32.totalorder %s100, %s101
      %p115 = scmp.eq.s32.totalorder %s27, 1
      %p116 = por %p114, %p115
      %p118 = scmp.ne.s32.totalorder %s101, %s117
      %p119 = scmp.eq.s32.totalorder %s27, 0
      %p120 = por %p118, %p119
      %s122 = sadd.s32 %s121, 1
      %p125 = scmp.eq.s32.totalorder %s21, 1
      %p126 = scmp.ne.s32.totalorder %s121, %s123
      %p127 = scmp.eq.s32.totalorder %s21, 0
      %p128 = por %p126, %p127
      %p129 = scmp.ne.s32.totalorder %s121, %s123
      %p130 = scmp.eq.s32.totalorder %s26, 1
      %p131 = por %p129, %p130
      %p132 = scmp.ne.s32.totalorder %s123, %s124
      %p133 = scmp.eq.s32.totalorder %s26, 0
      %p134 = por %p132, %p133
      %p135 = scmp.ne.s32.totalorder %s123, %s124
      %p136 = scmp.eq.s32.totalorder %s27, 1
      %p137 = por %p135, %p136
      %p139 = scmp.ne.s32.totalorder %s124, %s138
      %p140 = scmp.eq.s32.totalorder %s27, 0
      %p141 = por %p139, %p140
      %s143 = sadd.s32 %s142, 1
      %p146 = scmp.eq.s32.totalorder %s21, 1
      %p147 = scmp.ne.s32.totalorder %s142, %s144
      %p148 = scmp.eq.s32.totalorder %s21, 0
      %p149 = por %p147, %p148
      %p150 = scmp.ne.s32.totalorder %s142, %s144
      %p151 = scmp.eq.s32.totalorder %s26, 1
      %p152 = por %p150, %p151
      %p153 = scmp.ne.s32.totalorder %s144, %s145
      %p154 = scmp.eq.s32.totalorder %s26, 0
      %p155 = por %p153, %p154
      %p156 = scmp.ne.s32.totalorder %s144, %s145
      %p157 = scmp.eq.s32.totalorder %s27, 1
      %p158 = por %p156, %p157
      %p160 = scmp.ne.s32.totalorder %s145, %s159
      %p161 = scmp.eq.s32.totalorder %s27, 0
      %p162 = por %p160, %p161
      %s164 = sadd.s32 %s163, 1
      %p167 = scmp.eq.s32.totalorder %s21, 1
      %p168 = scmp.ne.s32.totalorder %s163, %s165
      %p169 = scmp.eq.s32.totalorder %s21, 0
      %p170 = por %p168, %p169
      %p171 = scmp.ne.s32.totalorder %s163, %s165
      %p172 = scmp.eq.s32.totalorder %s26, 1
      %p173 = por %p171, %p172
      %p174 = scmp.ne.s32.totalorder %s165, %s166
      %p175 = scmp.eq.s32.totalorder %s26, 0
      %p176 = por %p174, %p175
      %p177 = scmp.ne.s32.totalorder %s165, %s166
      %p178 = scmp.eq.s32.totalorder %s27, 1
      %p179 = por %p177, %p178
      %p181 = scmp.ne.s32.totalorder %s166, %s180
      %p182 = scmp.eq.s32.totalorder %s27, 0
      %p183 = por %p181, %p182
      %s185 = sadd.s32 %s184, 1
      %p188 = scmp.eq.s32.totalorder %s21, 1
      %p189 = scmp.ne.s32.totalorder %s184, %s186
      %p190 = scmp.eq.s32.totalorder %s21, 0
      %p191 = por %p189, %p190
      %p192 = scmp.ne.s32.totalorder %s184, %s186
      %p193 = scmp.eq.s32.totalorder %s26, 1
      %p194 = por %p192, %p193
      %p195 = scmp.ne.s32.totalorder %s186, %s187
      %p196 = scmp.eq.s32.totalorder %s26, 0
      %p197 = por %p195, %p196
      %p198 = scmp.ne.s32.totalorder %s186, %s187
      %p199 = scmp.eq.s32.totalorder %s27, 1
      %p200 = por %p198, %p199
      %p202 = scmp.ne.s32.totalorder %s187, %s201
      %p203 = scmp.eq.s32.totalorder %s27, 0
      %p204 = por %p202, %p203
      %s206 = sadd.s32 %s205, 1
      %p209 = scmp.eq.s32.totalorder %s21, 1
      %p210 = scmp.ne.s32.totalorder %s205, %s207
      %p211 = scmp.eq.s32.totalorder %s21, 0
      %p212 = por %p210, %p211
      %p213 = scmp.ne.s32.totalorder %s205, %s207
      %p214 = scmp.eq.s32.totalorder %s26, 1
      %p215 = por %p213, %p214
      %p216 = scmp.ne.s32.totalorder %s207, %s208
      %p217 = scmp.eq.s32.totalorder %s26, 0
      %p218 = por %p216, %p217
      %p219 = scmp.ne.s32.totalorder %s207, %s208
      %p220 = scmp.eq.s32.totalorder %s27, 1
      %p221 = por %p219, %p220
      %p223 = scmp.ne.s32.totalorder %s208, %s222
      %p224 = scmp.eq.s32.totalorder %s27, 0
      %p225 = por %p223, %p224
      %s227 = sadd.s32 %s226, 1
      %p230 = scmp.eq.s32.totalorder %s21, 1
      %p231 = scmp.ne.s32.totalorder %s226, %s228
      %p232 = scmp.eq.s32.totalorder %s21, 0
      %p233 = por %p231, %p232
      %p234 = scmp.ne.s32.totalorder %s226, %s228
      %p235 = scmp.eq.s32.totalorder %s26, 1
      %p236 = por %p234, %p235
      %p237 = scmp.ne.s32.totalorder %s228, %s229
      %p238 = scmp.eq.s32.totalorder %s26, 0
      %p239 = por %p237, %p238
      %p240 = scmp.ne.s32.totalorder %s228, %s229
      %p241 = scmp.eq.s32.totalorder %s27, 1
      %p242 = por %p240, %p241
      %p244 = scmp.ne.s32.totalorder %s229, %s243
      %p245 = scmp.eq.s32.totalorder %s27, 0
      %p246 = por %p244, %p245
      %s248 = sadd.s32 %s247, 1
      %p251 = scmp.eq.s32.totalorder %s21, 1
      %p252 = scmp.ne.s32.totalorder %s247, %s249
      %p253 = scmp.eq.s32.totalorder %s21, 0
      %p254 = por %p252, %p253
      %p255 = scmp.ne.s32.totalorder %s247, %s249
      %p256 = scmp.eq.s32.totalorder %s26, 1
      %p257 = por %p255, %p256
      %p258 = scmp.ne.s32.totalorder %s249, %s250
      %p259 = scmp.eq.s32.totalorder %s26, 0
      %p260 = por %p258, %p259
      %p261 = scmp.ne.s32.totalorder %s249, %s250
      %p262 = scmp.eq.s32.totalorder %s27, 1
      %p263 = por %p261, %p262
      %p265 = scmp.ne.s32.totalorder %s250, %s264
      %p266 = scmp.eq.s32.totalorder %s27, 0
      %p267 = por %p265, %p266
      %s269 = sadd.s32 %s268, 1
      %p272 = scmp.eq.s32.totalorder %s21, 1
      %p273 = scmp.ne.s32.totalorder %s268, %s270
      %p274 = scmp.eq.s32.totalorder %s21, 0
      %p275 = por %p273, %p274
      %p276 = scmp.ne.s32.totalorder %s268, %s270
      %p277 = scmp.eq.s32.totalorder %s26, 1
      %p278 = por %p276, %p277
      %p279 = scmp.ne.s32.totalorder %s270, %s271
      %p280 = scmp.eq.s32.totalorder %s26, 0
      %p281 = por %p279, %p280
      %p282 = scmp.ne.s32.totalorder %s270, %s271
      %p283 = scmp.eq.s32.totalorder %s27, 1
      %p284 = por %p282, %p283
      %p286 = scmp.ne.s32.totalorder %s271, %s285
      %p287 = scmp.eq.s32.totalorder %s27, 0
      %p288 = por %p286, %p287
      %s290 = sadd.s32 %s289, 1
      %p293 = scmp.eq.s32.totalorder %s21, 1
      %p294 = scmp.ne.s32.totalorder %s289, %s291
      %p295 = scmp.eq.s32.totalorder %s21, 0
      %p296 = por %p294, %p295
      %p297 = scmp.ne.s32.totalorder %s289, %s291
      %p298 = scmp.eq.s32.totalorder %s26, 1
      %p299 = por %p297, %p298
      %p300 = scmp.ne.s32.totalorder %s291, %s292
      %p301 = scmp.eq.s32.totalorder %s26, 0
      %p302 = por %p300, %p301
      %p303 = scmp.ne.s32.totalorder %s291, %s292
      %p304 = scmp.eq.s32.totalorder %s27, 1
      %p305 = por %p303, %p304
      %p307 = scmp.ne.s32.totalorder %s292, %s306
      %p308 = scmp.eq.s32.totalorder %s27, 0
      %p309 = por %p307, %p308
      %s310 = ssub.s32 %s28, %s40
      %s311 = ssub.s32 %s29, %s36
      %s312 = sor.u32 %s310, %s311
      %p313 = scmp.eq.s32.totalorder %s312, 0
      %s315 = sadd.s32 %s314, 1
      %s316 = scalar_select %p313, %s314, %s315
      %p319 = pneg %p313
      %p320 = scmp.eq.s32.totalorder %s21, 1
      %p321 = por %p319, %p320
      %p322 = scmp.ne.s32.totalorder %s314, %s317
      %p323 = scmp.eq.s32.totalorder %s21, 0
      %p324 = por %p322, %p323
      %p325 = scmp.ne.s32.totalorder %s314, %s317
      %p326 = scmp.eq.s32.totalorder %s26, 1
      %p327 = por %p325, %p326
      %p328 = scmp.ne.s32.totalorder %s317, %s318
      %p329 = scmp.eq.s32.totalorder %s26, 0
      %p330 = por %p328, %p329
      %p331 = scmp.ne.s32.totalorder %s317, %s318
      %p332 = scmp.eq.s32.totalorder %s27, 1
      %p333 = por %p331, %p332
      %p335 = scmp.ne.s32.totalorder %s318, %s334
      %p336 = scmp.eq.s32.totalorder %s27, 0
      %p337 = por %p335, %p336
      %p338 = scmp.le.s32.totalorder 1, %s21
      %p339 = scmp.lt.s32.totalorder %s21, 3
      %p340 = pnand %p338, %p339
      %p341 = pneg %p340
      // Predicated region
      $region9: #{tpu_custom_call.1} parent=5 // pred_check
        _
      $region10: #{tpu_custom_call.1} parent=5 // pred_check_branch
        %343 = sbr.rel (%p340) target = $region12
      $region11: #{tpu_custom_call.1} parent=5 // pred_region
        %s344 = ssub.s32 %s21, 1
        // Predicated region
        $region13: #{tpu_custom_call.1} parent=11 // pred_check
          %p345 = pneg %p134
        $region14: #{tpu_custom_call.1} parent=11 // pred_check_branch
          %347 = sbr.rel (%p345) target = $region16
        $region15: #{tpu_custom_call.1} parent=11 // pred_region
          _
        $region16: #{tpu_custom_call.1} parent=11 // pred_fallthru
          _
        // Predicated region
        $region17: #{tpu_custom_call.1} parent=11 // pred_check
          %p348 = pneg %p155
        $region18: #{tpu_custom_call.1} parent=11 // pred_check_branch
          %350 = sbr.rel (%p348) target = $region20
        $region19: #{tpu_custom_call.1} parent=11 // pred_region
          _
        $region20: #{tpu_custom_call.1} parent=11 // pred_fallthru
          _
        // Predicated region
        $region21: #{tpu_custom_call.1} parent=11 // pred_check
          %p351 = pneg %p176
        $region22: #{tpu_custom_call.1} parent=11 // pred_check_branch
          %353 = sbr.rel (%p351) target = $region24
        $region23: #{tpu_custom_call.1} parent=11 // pred_region
          _
        $region24: #{tpu_custom_call.1} parent=11 // pred_fallthru
          _
        // Predicated region
        $region25: #{tpu_custom_call.1} parent=11 // pred_check
          %p354 = pneg %p197
        $region26: #{tpu_custom_call.1} parent=11 // pred_check_branch
          %356 = sbr.rel (%p354) target = $region28
        $region27: #{tpu_custom_call.1} parent=11 // pred_region
          _
        $region28: #{tpu_custom_call.1} parent=11 // pred_fallthru
          _
        // Predicated region
        $region29: #{tpu_custom_call.1} parent=11 // pred_check
          %p357 = pneg %p218
        $region30: #{tpu_custom_call.1} parent=11 // pred_check_branch
          %359 = sbr.rel (%p357) target = $region32
        $region31: #{tpu_custom_call.1} parent=11 // pred_region
          _
        $region32: #{tpu_custom_call.1} parent=11 // pred_fallthru
          _
        // Predicated region
        $region33: #{tpu_custom_call.1} parent=11 // pred_check
          %p360 = pneg %p239
        $region34: #{tpu_custom_call.1} parent=11 // pred_check_branch
          %362 = sbr.rel (%p360) target = $region36
        $region35: #{tpu_custom_call.1} parent=11 // pred_region
          _
        $region36: #{tpu_custom_call.1} parent=11 // pred_fallthru
          _
        // Predicated region
        $region37: #{tpu_custom_call.1} parent=11 // pred_check
          %p363 = pneg %p260
        $region38: #{tpu_custom_call.1} parent=11 // pred_check_branch
          %365 = sbr.rel (%p363) target = $region40
        $region39: #{tpu_custom_call.1} parent=11 // pred_region
          _
        $region40: #{tpu_custom_call.1} parent=11 // pred_fallthru
          _
        // Predicated region
        $region41: #{tpu_custom_call.1} parent=11 // pred_check
          %p366 = pneg %p281
        $region42: #{tpu_custom_call.1} parent=11 // pred_check_branch
          %368 = sbr.rel (%p366) target = $region44
        $region43: #{tpu_custom_call.1} parent=11 // pred_region
          _
        $region44: #{tpu_custom_call.1} parent=11 // pred_fallthru
          _
        // Predicated region
        $region45: #{tpu_custom_call.1} parent=11 // pred_check
          %p369 = pneg %p302
        $region46: #{tpu_custom_call.1} parent=11 // pred_check_branch
          %371 = sbr.rel (%p369) target = $region48
        $region47: #{tpu_custom_call.1} parent=11 // pred_region
          _
        $region48: #{tpu_custom_call.1} parent=11 // pred_fallthru
          _
      $region12: #{tpu_custom_call.1} parent=5 // pred_fallthru
        _
      %p372 = scmp.lt.s32.totalorder %s21, 2
      // Predicated region
      $region49: #{tpu_custom_call.1} parent=5 // pred_check
        %p373 = pneg %p372
      $region50: #{tpu_custom_call.1} parent=5 // pred_check_branch
        %375 = sbr.rel (%p373) target = $region52
      $region51: #{tpu_custom_call.1} parent=5 // pred_region
        // Predicated region
        $region53: #{tpu_custom_call.1} parent=51 // pred_check
          %p376 = pneg %p55
        $region54: #{tpu_custom_call.1} parent=51 // pred_check_branch
          %378 = sbr.rel (%p376) target = $region56
        $region55: #{tpu_custom_call.1} parent=51 // pred_region
          %s379 = smul.u32 2, %s29
          %p380 = scmp.lt.s32.totalorder %s28, 1
          %s381 = scalar_select %p380, %s28, 1
          %p382 = scmp.lt.s32.totalorder %s379, 1
          %s383 = scalar_select %p382, %s379, 1
          %s384 = smul.addr %s381, 4
          %s385 = sadd.s32 %s383, %s384
          %s386 = smul.addr %s385, 4
          %s387 = scalar_lea.vmem %s0, %s386
          %s388 = smul.u32 2, %s29
        $region56: #{tpu_custom_call.1} parent=51 // pred_fallthru
          _
        // Predicated region
        $region57: #{tpu_custom_call.1} parent=51 // pred_check
          %p389 = pneg %p81
        $region58: #{tpu_custom_call.1} parent=51 // pred_check_branch
          %391 = sbr.rel (%p389) target = $region60
        $region59: #{tpu_custom_call.1} parent=51 // pred_region
          %p392 = scmp.lt.s32.totalorder %s28, 1
          %s393 = scalar_select %p392, %s28, 1
          %s394 = smul.addr %s393, 4
          %s395 = scalar_lea.vmem %s1, %s394
        $region60: #{tpu_custom_call.1} parent=51 // pred_fallthru
          _
        // Predicated region
        $region61: #{tpu_custom_call.1} parent=51 // pred_check
          %p396 = pneg %p107
        $region62: #{tpu_custom_call.1} parent=51 // pred_check_branch
          %398 = sbr.rel (%p396) target = $region64
        $region63: #{tpu_custom_call.1} parent=51 // pred_region
          %p399 = scmp.lt.s32.totalorder %s28, 1
          %s400 = scalar_select %p399, %s28, 1
          %s401 = smul.addr %s400, 4
          %s402 = scalar_lea.vmem %s2, %s401
        $region64: #{tpu_custom_call.1} parent=51 // pred_fallthru
          _
      $region52: #{tpu_custom_call.1} parent=5 // pred_fallthru
        _
      %p403 = scmp.le.s32.totalorder 1, %s21
      %p404 = scmp.lt.s32.totalorder %s21, 3
      %p405 = pnand %p403, %p404
      %p406 = pneg %p405
      // Predicated region
      $region65: #{tpu_custom_call.1} parent=5 // pred_check
        _
      $region66: #{tpu_custom_call.1} parent=5 // pred_check_branch
        %408 = sbr.rel (%p405) target = $region68
      $region67: #{tpu_custom_call.1} parent=5 // pred_region
        %s409 = ssub.s32 %s21, 1
        %s410 = smul.u32 2, %s31
        %p411 = scmp.lt.s32.totalorder %s30, 1
        %s412 = scalar_select %p411, %s30, 1
        %p413 = scmp.lt.s32.totalorder %s410, 1
        %s414 = scalar_select %p413, %s410, 1
        %s415 = smul.addr %s412, 4
        %s416 = sadd.s32 %s414, %s415
        %s417 = smul.addr %s416, 4
        %s418 = scalar_lea.vmem %s0, %s417
        %p419 = pneg %p61
        %p420 = pneg %p58
        %p421 = scmp.lt.s32.totalorder %s30, 1
        %s422 = scalar_select %p421, %s30, 1
        %s423 = smul.addr %s422, 4
        %s424 = scalar_lea.vmem %s1, %s423
        %p425 = pneg %p87
        %p426 = pneg %p84
        %p427 = scmp.lt.s32.totalorder %s30, 1
        %s428 = scalar_select %p427, %s30, 1
        %s429 = smul.addr %s428, 4
        %s430 = scalar_lea.vmem %s2, %s429
        %p431 = pneg %p113
        %p432 = pneg %p110
        %p433 = pneg %p134
        %p434 = pneg %p131
        %p435 = pneg %p155
        %p436 = pneg %p152
        %p437 = pneg %p176
        %p438 = pneg %p173
        %p439 = pneg %p197
        %p440 = pneg %p194
        %p441 = pneg %p218
        %p442 = pneg %p215
        %p443 = pneg %p239
        %p444 = pneg %p236
        %p445 = pneg %p260
        %p446 = pneg %p257
        %p447 = pneg %p281
        %p448 = pneg %p278
        %p449 = pneg %p302
        %p450 = pneg %p299
        %p451 = pneg %p330
        %p452 = pneg %p327
        %s453 = sand.u32 %s317, 1
        %s454 = scalar_lea.sflag [#allocation3], %s453
        %s455 = sand.u32 %s317, 1
        %s456 = smul.addr %s455, 16
        %s457 = scalar_lea.vmem [#allocation2], %s456
        %s458 = smul.u32 2, %s31
        %p459 = scmp.lt.s32.totalorder %s30, 1
        %s460 = scalar_select %p459, %s30, 1
        %p461 = scmp.lt.s32.totalorder %s458, 1
        %s462 = scalar_select %p461, %s458, 1
        %s463 = smul.addr %s460, 4
        %s464 = sadd.s32 %s462, %s463
        %s465 = smul.addr %s464, 4
        %s466 = scalar_lea.vmem %s0, %s465
        %s467 = smul.u32 2, %s31
        %p468 = scmp.lt.s32.totalorder %s30, 1
        %s469 = scalar_select %p468, %s30, 1
        %s470 = smul.addr %s469, 4
        %s471 = scalar_lea.vmem %s1, %s470
        %p472 = scmp.lt.s32.totalorder %s30, 1
        %s473 = scalar_select %p472, %s30, 1
        %s474 = smul.addr %s473, 4
        %s475 = scalar_lea.vmem %s2, %s474
        %s476 = smul.u32 2, %s31
        %v478 = vld [vmem:[%s466] sm:$0xff]
        %v479 = vld [vmem:[%s466 + $0x8] sm:$0xff]
        %v480 = vld [vmem:[%s471] sm:$0xf]
        %v481 = vld [vmem:[%s475] sm:$0xf]
        %v482 = vld [vmem:[%s3] sm:$0xf]
        %v483 = vld [vmem:[%s4] sm:$0xff]
        %485 = vset.pattern.permute.xlu0 0
        %486 = vperm.xlu0 %485, %v483
        %v487 = vpop.permute.xlu0 %486
        %v491 = vunpack.c.l.b16 %v478
        %v492 = vunpack.c.h.b16 %v478
        %v493 = vunpack.c.l.b16 %v479
        %v494 = vunpack.c.h.b16 %v479
        %v495 = vpack.c.b16 %v493, %v491
        %v496 = vpack.c.b16 %v494, %v492
        %vm499 = vcmask 130048
        %v501 = vsel %vm499, %v482, 0
        %503 = vmatprep.subr.bf16.mxu0 %v496
        %504 = vmatpush1.bf16.msra.mxu0 %v495
        %505 = vmatprep.subr.bf16.mxu0 0
        %506 = vmatpush1.bf16.msra.mxu0 0
        %507 = vmatprep.subr.bf16.mxu0 0
        %508 = vmatpush1.bf16.msra.mxu0 0
        %509 = vmatprep.subr.bf16.mxu0 0
        %510 = vmatpush1.bf16.msra.mxu0 0
        %511 = vmatprep.subr.bf16.mxu0 0
        %512 = vmatpush1.bf16.msra.mxu0 0
        %513 = vmatprep.subr.bf16.mxu0 0
        %514 = vmatpush1.bf16.msra.mxu0 0
        %515 = vmatprep.subr.bf16.mxu0 0
        %516 = vmatpush1.bf16.msra.mxu0 0
        %517 = vmatprep.subr.bf16.mxu0 0
        %518 = vmatpush1.bf16.msra.mxu0 0
        %519 = vmatprep.subr.bf16.mxu0 0
        %520 = vmatpush1.bf16.msra.mxu0 0
        %521 = vmatprep.subr.bf16.mxu0 0
        %522 = vmatpush1.bf16.msra.mxu0 0
        %523 = vmatprep.subr.bf16.mxu0 0
        %524 = vmatpush1.bf16.msra.mxu0 0
        %525 = vmatprep.subr.bf16.mxu0 0
        %526 = vmatpush1.bf16.msra.mxu0 0
        %527 = vmatprep.subr.bf16.mxu0 0
        %528 = vmatpush1.bf16.msra.mxu0 0
        %529 = vmatprep.subr.bf16.mxu0 0
        %530 = vmatpush1.bf16.msra.mxu0 0
        %531 = vmatprep.subr.bf16.mxu0 0
        %532 = vmatpush1.bf16.msra.mxu0 0
        %533 = vmatprep.subr.bf16.mxu0 0
        %534 = vmatpush1.bf16.msra.mxu0 0
        %535 = vmatprep.mubr.bf16.mxu0 0
        %536 = vmatmul.mubr.bf16.gmra.mrb[0].mxu0 %v501
        %v537 = vpop.f32.mrb[0].mxu0
        %v538 = vadd.f32 %v487, %v537
        %v539 = vpop.f32.mrb[0].mxu0
        %v540 = vadd.f32 %v487, %v539
        %v541 = vpop.f32.mrb[0].mxu0
        %v542 = vpop.f32.mrb[0].mxu0
        %543 = vdwg.mxu0
        %v544 = vmax.f32 %v538, 0.0
        %v545 = vmax.f32 %v540, 0.0
        %v546 = vld [vmem:[%s5] sm:$0xf]
        %v547 = vpack.c.bf16 %v544, %v544
        %v548 = vpack.c.bf16 %v545, %v545
        %v549 = vld [vmem:[%s6] sm:$0xff]
        %551 = vset.pattern.permute.xlu0 0
        %552 = vperm.xlu0 %551, %v549
        %v553 = vpop.permute.xlu0 %552
        %vm555 = vcmask 64512
        %v557 = vsel %vm555, %v546, 0
        %vm559 = vcmask 1043456
        %v561 = vsel %vm559, %v547, 0
        %v564 = vsel %vm559, %v548, 0
        %566 = vmatprep.subr.bf16.mxu0 %v564
        %567 = vmatpush1.bf16.msra.mxu0 %v561
        %568 = vmatprep.subr.bf16.mxu0 0
        %569 = vmatpush1.bf16.msra.mxu0 0
        %570 = vmatprep.subr.bf16.mxu0 0
        %571 = vmatpush1.bf16.msra.mxu0 0
        %572 = vmatprep.subr.bf16.mxu0 0
        %573 = vmatpush1.bf16.msra.mxu0 0
        %574 = vmatprep.subr.bf16.mxu0 0
        %575 = vmatpush1.bf16.msra.mxu0 0
        %576 = vmatprep.subr.bf16.mxu0 0
        %577 = vmatpush1.bf16.msra.mxu0 0
        %578 = vmatprep.subr.bf16.mxu0 0
        %579 = vmatpush1.bf16.msra.mxu0 0
        %580 = vmatprep.subr.bf16.mxu0 0
        %581 = vmatpush1.bf16.msra.mxu0 0
        %582 = vmatprep.subr.bf16.mxu0 0
        %583 = vmatpush1.bf16.msra.mxu0 0
        %584 = vmatprep.subr.bf16.mxu0 0
        %585 = vmatpush1.bf16.msra.mxu0 0
        %586 = vmatprep.subr.bf16.mxu0 0
        %587 = vmatpush1.bf16.msra.mxu0 0
        %588 = vmatprep.subr.bf16.mxu0 0
        %589 = vmatpush1.bf16.msra.mxu0 0
        %590 = vmatprep.subr.bf16.mxu0 0
        %591 = vmatpush1.bf16.msra.mxu0 0
        %592 = vmatprep.subr.bf16.mxu0 0
        %593 = vmatpush1.bf16.msra.mxu0 0
        %594 = vmatprep.subr.bf16.mxu0 0
        %595 = vmatpush1.bf16.msra.mxu0 0
        %596 = vmatprep.subr.bf16.mxu0 0
        %597 = vmatpush1.bf16.msra.mxu0 0
        %598 = vmatprep.mubr.bf16.mxu0 0
        %599 = vmatmul.mubr.bf16.gmra.mrb[0].mxu0 %v557
        %v600 = vpop.f32.mrb[0].mxu0
        %v601 = vadd.f32 %v553, %v600
        %v602 = vpop.f32.mrb[0].mxu0
        %v603 = vadd.f32 %v553, %v602
        %v604 = vpop.f32.mrb[0].mxu0
        %v605 = vpop.f32.mrb[0].mxu0
        %606 = vdwg.mxu0
        %v607 = vmax.f32 %v601, 0.0
        %v608 = vmax.f32 %v603, 0.0
        %v609 = vpack.c.bf16 %v607, %v607
        %v610 = vpack.c.bf16 %v608, %v608
        %v612 = vsel %vm555, %v480, 0
        %v615 = vsel %vm559, %v609, 0
        %v618 = vsel %vm559, %v610, 0
        %620 = vmatprep.subr.bf16.mxu0 %v618
        %621 = vmatpush1.bf16.msra.mxu0 %v615
        %622 = vmatprep.subr.bf16.mxu0 0
        %623 = vmatpush1.bf16.msra.mxu0 0
        %624 = vmatprep.subr.bf16.mxu0 0
        %625 = vmatpush1.bf16.msra.mxu0 0
        %626 = vmatprep.subr.bf16.mxu0 0
        %627 = vmatpush1.bf16.msra.mxu0 0
        %628 = vmatprep.subr.bf16.mxu0 0
        %629 = vmatpush1.bf16.msra.mxu0 0
        %630 = vmatprep.subr.bf16.mxu0 0
        %631 = vmatpush1.bf16.msra.mxu0 0
        %632 = vmatprep.subr.bf16.mxu0 0
        %633 = vmatpush1.bf16.msra.mxu0 0
        %634 = vmatprep.subr.bf16.mxu0 0
        %635 = vmatpush1.bf16.msra.mxu0 0
        %636 = vmatprep.subr.bf16.mxu0 0
        %637 = vmatpush1.bf16.msra.mxu0 0
        %638 = vmatprep.subr.bf16.mxu0 0
        %639 = vmatpush1.bf16.msra.mxu0 0
        %640 = vmatprep.subr.bf16.mxu0 0
        %641 = vmatpush1.bf16.msra.mxu0 0
        %642 = vmatprep.subr.bf16.mxu0 0
        %643 = vmatpush1.bf16.msra.mxu0 0
        %644 = vmatprep.subr.bf16.mxu0 0
        %645 = vmatpush1.bf16.msra.mxu0 0
        %646 = vmatprep.subr.bf16.mxu0 0
        %647 = vmatpush1.bf16.msra.mxu0 0
        %648 = vmatprep.subr.bf16.mxu0 0
        %649 = vmatpush1.bf16.msra.mxu0 0
        %650 = vmatprep.subr.bf16.mxu0 0
        %651 = vmatpush1.bf16.msra.mxu0 0
        %652 = vmatprep.mubr.bf16.mxu0 0
        %653 = vmatmul.mubr.bf16.gmra.mrb[0].mxu0 %v612
        %v654 = vpop.f32.mrb[0].mxu0
        %v655 = vadd.f32 0.0, %v654
        %v656 = vpop.f32.mrb[0].mxu0
        %v657 = vadd.f32 0.0, %v656
        %v658 = vpop.f32.mrb[0].mxu0
        %v659 = vpop.f32.mrb[0].mxu0
        %660 = vdwg.mxu0
        %v661 = vrot.slane %v655, 4
        %v662 = vmax.f32 %v655, %v661
        %v663 = vrot.slane %v662, 2
        %v664 = vmax.f32 %v662, %v663
        %v665 = vrot.slane %v664, 1
        %v666 = vmax.f32 %v664, %v665
        %v667 = vrot.slane %v657, 4
        %v668 = vmax.f32 %v657, %v667
        %v669 = vrot.slane %v668, 2
        %v670 = vmax.f32 %v668, %v669
        %v671 = vrot.slane %v670, 1
        %v672 = vmax.f32 %v670, %v671
        %v673 = vsub.f32 %v655, %v666
        %v674 = vsub.f32 %v657, %v672
        %v675 = vmul.f32 %v673, 1.442695
        %v676 = vpow.pop %v675
        %v677 = vmul.f32 %v674, 1.442695
        %v678 = vpow.pop %v677
        %v679 = vrot.slane %v676, 4
        %v680 = vadd.f32 %v676, %v679
        %v681 = vrot.slane %v680, 2
        %v682 = vadd.f32 %v680, %v681
        %v683 = vrot.slane %v682, 1
        %v684 = vadd.f32 %v682, %v683
        %v685 = vrot.slane %v678, 4
        %v686 = vadd.f32 %v678, %v685
        %v687 = vrot.slane %v686, 2
        %v688 = vadd.f32 %v686, %v687
        %v689 = vrot.slane %v688, 1
        %v690 = vadd.f32 %v688, %v689
        %v691 = vrcp.pop %v684
        %v692 = vrcp.pop %v690
        %v693 = vmul.f32 %v676, %v691
        %v694 = vmul.f32 %v678, %v692
        %v695 = vpack.c.bf16 %v693, %v693
        %v696 = vpack.c.bf16 %v694, %v694
        %v698 = vsel %vm555, %v481, 0
        %v701 = vsel %vm559, %v695, 0
        %v704 = vsel %vm559, %v696, 0
        %706 = vmatprep.subr.bf16.mxu0 %v704
        %707 = vmatpush1.bf16.msra.mxu0 %v701
        %708 = vmatprep.subr.bf16.mxu0 0
        %709 = vmatpush1.bf16.msra.mxu0 0
        %710 = vmatprep.subr.bf16.mxu0 0
        %711 = vmatpush1.bf16.msra.mxu0 0
        %712 = vmatprep.subr.bf16.mxu0 0
        %713 = vmatpush1.bf16.msra.mxu0 0
        %714 = vmatprep.subr.bf16.mxu0 0
        %715 = vmatpush1.bf16.msra.mxu0 0
        %716 = vmatprep.subr.bf16.mxu0 0
        %717 = vmatpush1.bf16.msra.mxu0 0
        %718 = vmatprep.subr.bf16.mxu0 0
        %719 = vmatpush1.bf16.msra.mxu0 0
        %720 = vmatprep.subr.bf16.mxu0 0
        %721 = vmatpush1.bf16.msra.mxu0 0
        %722 = vmatprep.subr.bf16.mxu0 0
        %723 = vmatpush1.bf16.msra.mxu0 0
        %724 = vmatprep.subr.bf16.mxu0 0
        %725 = vmatpush1.bf16.msra.mxu0 0
        %726 = vmatprep.subr.bf16.mxu0 0
        %727 = vmatpush1.bf16.msra.mxu0 0
        %728 = vmatprep.subr.bf16.mxu0 0
        %729 = vmatpush1.bf16.msra.mxu0 0
        %730 = vmatprep.subr.bf16.mxu0 0
        %731 = vmatpush1.bf16.msra.mxu0 0
        %732 = vmatprep.subr.bf16.mxu0 0
        %733 = vmatpush1.bf16.msra.mxu0 0
        %734 = vmatprep.subr.bf16.mxu0 0
        %735 = vmatpush1.bf16.msra.mxu0 0
        %736 = vmatprep.subr.bf16.mxu0 0
        %737 = vmatpush1.bf16.msra.mxu0 0
        %738 = vmatprep.mubr.bf16.mxu0 0
        %739 = vmatmul.mubr.bf16.gmra.mrb[0].mxu0 %v698
        %v740 = vpop.f32.mrb[0].mxu0
        %v741 = vadd.f32 0.0, %v740
        %v742 = vpop.f32.mrb[0].mxu0
        %v743 = vadd.f32 0.0, %v742
        %v744 = vpop.f32.mrb[0].mxu0
        %v745 = vpop.f32.mrb[0].mxu0
        %746 = vdwg.mxu0
        %v747 = vld [vmem:[%s7] sm:$0xf]
        %v748 = vld [vmem:[%s7 + $0x4] sm:$0xf]
        %v749 = vpack.c.bf16 %v741, %v741
        %v750 = vpack.c.bf16 %v743, %v743
        %v751 = vld [vmem:[%s8] sm:$0xff]
        %v752 = vld [vmem:[%s8 + $0x8] sm:$0xff]
        %754 = vset.pattern.permute.xlu0 0
        %755 = vperm.xlu0 %754, %v751
        %v756 = vpop.permute.xlu0 %755
        %759 = vset.pattern.permute.xlu0 0
        %760 = vperm.xlu0 %759, %v752
        %v761 = vpop.permute.xlu0 %760
        %v765 = vunpack.c.l.b16 %v747
        %v766 = vunpack.c.l.b16 %v748
        %v767 = vpack.c.b16 %v766, %v765
        %v769 = vsel %vm555, %v767, 0
        %v772 = vsel %vm559, %v749, 0
        %v775 = vsel %vm559, %v750, 0
        %777 = vmatprep.subr.bf16.mxu0 %v775
        %778 = vmatpush1.bf16.msra.mxu0 %v772
        %779 = vmatprep.subr.bf16.mxu0 0
        %780 = vmatpush1.bf16.msra.mxu0 0
        %781 = vmatprep.subr.bf16.mxu0 0
        %782 = vmatpush1.bf16.msra.mxu0 0
        %783 = vmatprep.subr.bf16.mxu0 0
        %784 = vmatpush1.bf16.msra.mxu0 0
        %785 = vmatprep.subr.bf16.mxu0 0
        %786 = vmatpush1.bf16.msra.mxu0 0
        %787 = vmatprep.subr.bf16.mxu0 0
        %788 = vmatpush1.bf16.msra.mxu0 0
        %789 = vmatprep.subr.bf16.mxu0 0
        %790 = vmatpush1.bf16.msra.mxu0 0
        %791 = vmatprep.subr.bf16.mxu0 0
        %792 = vmatpush1.bf16.msra.mxu0 0
        %793 = vmatprep.subr.bf16.mxu0 0
        %794 = vmatpush1.bf16.msra.mxu0 0
        %795 = vmatprep.subr.bf16.mxu0 0
        %796 = vmatpush1.bf16.msra.mxu0 0
        %797 = vmatprep.subr.bf16.mxu0 0
        %798 = vmatpush1.bf16.msra.mxu0 0
        %799 = vmatprep.subr.bf16.mxu0 0
        %800 = vmatpush1.bf16.msra.mxu0 0
        %801 = vmatprep.subr.bf16.mxu0 0
        %802 = vmatpush1.bf16.msra.mxu0 0
        %803 = vmatprep.subr.bf16.mxu0 0
        %804 = vmatpush1.bf16.msra.mxu0 0
        %805 = vmatprep.subr.bf16.mxu0 0
        %806 = vmatpush1.bf16.msra.mxu0 0
        %807 = vmatprep.subr.bf16.mxu0 0
        %808 = vmatpush1.bf16.msra.mxu0 0
        %809 = vmatprep.mubr.bf16.mxu0 0
        %810 = vmatmul.mubr.bf16.gmra.mrb[0].mxu0 %v769
        %v811 = vpop.f32.mrb[0].mxu0
        %v812 = vadd.f32 %v756, %v811
        %v813 = vpop.f32.mrb[0].mxu0
        %v814 = vadd.f32 %v756, %v813
        %v815 = vpop.f32.mrb[0].mxu0
        %v816 = vadd.f32 %v761, %v815
        %v817 = vpop.f32.mrb[0].mxu0
        %v818 = vadd.f32 %v761, %v817
        %819 = vdwg.mxu0
        %v820 = vmax.f32 %v812, 0.0
        %v821 = vmax.f32 %v814, 0.0
        %v822 = vmax.f32 %v816, 0.0
        %v823 = vmax.f32 %v818, 0.0
        %v824 = vld [vmem:[%s9] sm:$0xf]
        %v825 = vld [vmem:[%s9 + $0x4] sm:$0xf]
        %v826 = vpack.c.bf16 %v822, %v820
        %v827 = vpack.c.bf16 %v823, %v821
        %v828 = vld [vmem:[%s10] sm:$0xf]
        %v829 = vld [vmem:[%s10 + $0x4] sm:$0xf]
        %v832 = vunpack.c.l.b16 %v828
        %v833 = vunpack.c.l.b16 %v829
        %v834 = vpack.c.b16 %v833, %v832
        %v836 = vsel %vm499, %v834, 0
        %838 = vmatprep.subr.bf16.mxu0 %v496
        %839 = vmatpush1.bf16.msra.mxu0 %v495
        %840 = vmatprep.subr.bf16.mxu0 0
        %841 = vmatpush1.bf16.msra.mxu0 0
        %842 = vmatprep.subr.bf16.mxu0 0
        %843 = vmatpush1.bf16.msra.mxu0 0
        %844 = vmatprep.subr.bf16.mxu0 0
        %845 = vmatpush1.bf16.msra.mxu0 0
        %846 = vmatprep.subr.bf16.mxu0 0
        %847 = vmatpush1.bf16.msra.mxu0 0
        %848 = vmatprep.subr.bf16.mxu0 0
        %849 = vmatpush1.bf16.msra.mxu0 0
        %850 = vmatprep.subr.bf16.mxu0 0
        %851 = vmatpush1.bf16.msra.mxu0 0
        %852 = vmatprep.subr.bf16.mxu0 0
        %853 = vmatpush1.bf16.msra.mxu0 0
        %854 = vmatprep.subr.bf16.mxu0 0
        %855 = vmatpush1.bf16.msra.mxu0 0
        %856 = vmatprep.subr.bf16.mxu0 0
        %857 = vmatpush1.bf16.msra.mxu0 0
        %858 = vmatprep.subr.bf16.mxu0 0
        %859 = vmatpush1.bf16.msra.mxu0 0
        %860 = vmatprep.subr.bf16.mxu0 0
        %861 = vmatpush1.bf16.msra.mxu0 0
        %862 = vmatprep.subr.bf16.mxu0 0
        %863 = vmatpush1.bf16.msra.mxu0 0
        %864 = vmatprep.subr.bf16.mxu0 0
        %865 = vmatpush1.bf16.msra.mxu0 0
        %866 = vmatprep.subr.bf16.mxu0 0
        %867 = vmatpush1.bf16.msra.mxu0 0
        %868 = vmatprep.subr.bf16.mxu0 0
        %869 = vmatpush1.bf16.msra.mxu0 0
        %870 = vmatprep.mubr.bf16.mxu0 0
        %871 = vmatmul.mubr.bf16.gmra.mrb[0].mxu0 %v836
        %v872 = vpop.f32.mrb[0].mxu0
        %v873 = vadd.f32 0.0, %v872
        %v874 = vpop.f32.mrb[0].mxu0
        %v875 = vadd.f32 0.0, %v874
        %v876 = vpop.f32.mrb[0].mxu0
        %v877 = vadd.f32 0.0, %v876
        %v878 = vpop.f32.mrb[0].mxu0
        %v879 = vadd.f32 0.0, %v878
        %880 = vdwg.mxu0
        %v883 = vunpack.c.l.b16 %v824
        %v884 = vunpack.c.l.b16 %v825
        %v885 = vpack.c.b16 %v884, %v883
        %v887 = vsel %vm499, %v885, 0
        %889 = vmatprep.subr.bf16.mxu0 %v827
        %890 = vmatpush1.bf16.msra.mxu0 %v826
        %891 = vmatprep.subr.bf16.mxu0 0
        %892 = vmatpush1.bf16.msra.mxu0 0
        %893 = vmatprep.subr.bf16.mxu0 0
        %894 = vmatpush1.bf16.msra.mxu0 0
        %895 = vmatprep.subr.bf16.mxu0 0
        %896 = vmatpush1.bf16.msra.mxu0 0
        %897 = vmatprep.subr.bf16.mxu0 0
        %898 = vmatpush1.bf16.msra.mxu0 0
        %899 = vmatprep.subr.bf16.mxu0 0
        %900 = vmatpush1.bf16.msra.mxu0 0
        %901 = vmatprep.subr.bf16.mxu0 0
        %902 = vmatpush1.bf16.msra.mxu0 0
        %903 = vmatprep.subr.bf16.mxu0 0
        %904 = vmatpush1.bf16.msra.mxu0 0
        %905 = vmatprep.subr.bf16.mxu0 0
        %906 = vmatpush1.bf16.msra.mxu0 0
        %907 = vmatprep.subr.bf16.mxu0 0
        %908 = vmatpush1.bf16.msra.mxu0 0
        %909 = vmatprep.subr.bf16.mxu0 0
        %910 = vmatpush1.bf16.msra.mxu0 0
        %911 = vmatprep.subr.bf16.mxu0 0
        %912 = vmatpush1.bf16.msra.mxu0 0
        %913 = vmatprep.subr.bf16.mxu0 0
        %914 = vmatpush1.bf16.msra.mxu0 0
        %915 = vmatprep.subr.bf16.mxu0 0
        %916 = vmatpush1.bf16.msra.mxu0 0
        %917 = vmatprep.subr.bf16.mxu0 0
        %918 = vmatpush1.bf16.msra.mxu0 0
        %919 = vmatprep.subr.bf16.mxu0 0
        %920 = vmatpush1.bf16.msra.mxu0 0
        %921 = vmatprep.mubr.bf16.mxu0 0
        %922 = vmatmul.mubr.bf16.gmra.mrb[0].mxu0 %v887
        %v923 = vpop.f32.mrb[0].mxu0
        %v924 = vadd.f32 %v873, %v923
        %v925 = vpop.f32.mrb[0].mxu0
        %v926 = vadd.f32 %v875, %v925
        %v927 = vpop.f32.mrb[0].mxu0
        %v928 = vadd.f32 %v877, %v927
        %v929 = vpop.f32.mrb[0].mxu0
        %v930 = vadd.f32 %v879, %v929
        %931 = vdwg.mxu0
        %v932 = vld [vmem:[%s11] sm:$0xff]
        %v933 = vld [vmem:[%s11 + $0x8] sm:$0xff]
        %935 = vset.pattern.permute.xlu0 0
        %936 = vperm.xlu0 %935, %v932
        %v937 = vpop.permute.xlu0 %936
        %940 = vset.pattern.permute.xlu0 0
        %941 = vperm.xlu0 %940, %v933
        %v942 = vpop.permute.xlu0 %941
        %v944 = vadd.f32 %v924, %v937
        %v945 = vadd.f32 %v926, %v937
        %v946 = vadd.f32 %v928, %v942
        %v947 = vadd.f32 %v930, %v942
        %v948 = vmax.f32 %v944, 0.0
        %v949 = vmax.f32 %v945, 0.0
        %v950 = vmax.f32 %v946, 0.0
        %v951 = vmax.f32 %v947, 0.0
        %v952 = vpack.c.bf16 %v950, %v948
        %v953 = vpack.c.bf16 %v951, %v949
        %v956 = vunpack.c.l.b16 %v952
        %v957 = vunpack.c.l.b16 %v953
        %v958 = vunpack.c.h.b16 %v952
        %v959 = vunpack.c.h.b16 %v953
        %v960 = vpack.c.b16 %v957, %v956
        %v961 = vpack.c.b16 %v959, %v958
        %964 = vst [vmem:[%s457] sm:$0xff] %v960
        %965 = vst [vmem:[%s457 + $0x8] sm:$0xff] %v961
        %s966 = sand.u32 %s317, 1
        %s967 = scalar_lea.sflag [#allocation3], %s966
        %s968 = sand.u32 %s317, 1
        %s969 = smul.addr %s968, 16
        %s970 = scalar_lea.vmem [#allocation2], %s969
        // Predicated region
        $region69: #{tpu_custom_call.1} parent=67 // pred_check
          %p971 = pneg %p327
        $region70: #{tpu_custom_call.1} parent=67 // pred_check_branch
          %973 = sbr.rel (%p971) target = $region72
        $region71: #{tpu_custom_call.1} parent=67 // pred_region
          %s974 = smul.u32 2, %s31
          %s976 = ssub.s32 256, 256
          %977 = vsyncadd %s967, %s976
          %s978 = smul.addr %s30, 4
          %s979 = sadd.s32 %s974, %s978
          %s980 = smul.addr %s979, 64
          %s981 = scalar_lea.hbm %s12, %s980
          %s982 = sshll.u32 %s970, 4
          %s983 = int_to_ptr.vmem [resolvable:$true] %s982
          %988 = dma.vmem_to_hbm [thread:$0]  %s983, 256, %s981, %s967, 128, 128, 8
        $region72: #{tpu_custom_call.1} parent=67 // pred_fallthru
          _
      $region68: #{tpu_custom_call.1} parent=5 // pred_fallthru
        _
      %p989 = scmp.le.s32.totalorder 2, %s21
      // Predicated region
      $region73: #{tpu_custom_call.1} parent=5 // pred_check
        %p990 = pneg %p989
      $region74: #{tpu_custom_call.1} parent=5 // pred_check_branch
        %992 = sbr.rel (%p990) target = $region76
      $region75: #{tpu_custom_call.1} parent=5 // pred_region
        %s993 = ssub.s32 %s21, 2
        // Predicated region
        $region77: #{tpu_custom_call.1} parent=75 // pred_check
          %p994 = pneg %p333
        $region78: #{tpu_custom_call.1} parent=75 // pred_check_branch
          %996 = sbr.rel (%p994) target = $region80
        $region79: #{tpu_custom_call.1} parent=75 // pred_region
          %s997 = sand.u32 %s318, 1
          %s998 = scalar_lea.sflag [#allocation3], %s997
          %s999 = sand.u32 %s318, 1
          %s1000 = smul.addr %s999, 16
          %s1001 = scalar_lea.vmem [#allocation2], %s1000
          %1002 = dma.done %s998, 256
        $region80: #{tpu_custom_call.1} parent=75 // pred_fallthru
          _
      $region76: #{tpu_custom_call.1} parent=5 // pred_fallthru
        _
    $region6: #{tpu_custom_call.1} parent=1 // loop_footer
      %s25 = sadd.s32 1, %s21
    $region7: #{tpu_custom_call.1} parent=1 // loop_footer_branch
      %20 = sbr.rel target = $region3
    $region8: #{tpu_custom_call.1} parent=1 // loop_exit
      _
    %1003 = vsyncpa [#allocation3], 1
    %s1004 = scalar_lea.sflag [#allocation3], 1
    %1005 = vsyncpa %s1004, 1

</llo_original>
